<compile_context>
chip_gen: v5e
topology: v5e:2x2
jax: 0.10.0
libtpu: 0.0.40
codegen_flags: <defaults>
</compile_context>

<pallas_src>
import math

import jax
import jax.numpy as jnp
import numpy as np
from jax.experimental import pallas as pl
from jax.experimental.pallas import tpu as pltpu


def _choose_tiling(B, N, Ks, row_sizes, itemsize):
    """Pick (TN, NB): node-lane tile width and #batches stacked per grid step.

    TN is a 128-multiple divisor of N, as wide as the VMEM budget allows
    (lane-dense stores, full 256-lane MXU width on v6e/v7x).  NB packs batches
    into the matmul M dimension (target ~256 MXU rows) while keeping the
    double-buffered pipeline footprint under ~20 MiB so it fits the scoped-VMEM
    defaults of v5e/v6e and v7x's 64 MiB physical VMEM.
    """
    rows_x, rows_o, rows_e = row_sizes
    budget = 20 * 1024 * 1024

    def fits(tn, nb):
        kbuf = 2 * Ks * N * tn * itemsize            # per-tap graph-kernel tiles
        xbuf = 2 * nb * rows_x * N * itemsize        # stacked-batch x slab
        obuf = 2 * nb * rows_o * tn * 4              # output tile
        ebuf = 2 * nb * rows_e * tn * 4              # nn.Parameter tile
        scr = nb * (rows_o + 2 * rows_x) * tn * 4    # acc scratch + stage-1 temps
        wbuf = (Ks + 1) * rows_o * rows_x * 4
        return kbuf + xbuf + obuf + ebuf + scr + wbuf <= budget

    def rows_ok(nb):                                 # (8,128) second-minor rule
        return nb == B or all((nb * r) % 8 == 0 for r in row_sizes if r)

    nb_opts = [d for d in range(B, 0, -1) if B % d == 0 and rows_ok(d)] or [B]
    tn_opts = ([N] if N <= 512 else []) + [c for c in (512, 384, 256, 128) if N % c == 0]
    if not tn_opts:
        tn_opts = [128]

    for tn in tn_opts:
        for nb in nb_opts:
            if (nb * rows_x > 256) and nb != nb_opts[-1]:
                continue                             # target ~256 MXU rows
            if not fits(tn, nb):
                continue
            if (N // tn) * (B // nb) == 1 and B > 1 and len(nb_opts) > 1:
                nb = nb_opts[1]      # keep >=2 grid steps for the v7x megacore
            return tn, nb
    # TODO(synk): for very large N a contraction (input-node) grid axis would be
    # needed to bound the (N, TN) kernel-tile footprint; not required here.
    return tn_opts[-1], nb_opts[-1]


def _make_kernel(Ks, NB, rows_x, rows_o, rows_e, TN, mode):
    def kernel(*refs):
        x_ref = refs[0]                       # (NB*rows_x, N)   stacked batches
        ktaps = refs[1:1 + Ks]                # Ks x (N, TN)     resident per tile
        wb_ref = refs[1 + Ks]                 # (Ks, rows_o, rows_x)
        lb_ref = refs[2 + Ks]                 # (rows_o, 1)
        pos = 3 + Ks
        extra_ref = None
        if mode != "param_eq":
            extra_ref = refs[pos]
            pos += 1
        o_ref = refs[pos]                     # (NB*rows_o, TN)
        acc_ref = refs[pos + 1]               # VMEM scratch (NB*rows_o, TN) f32

        # lane offset of this node tile inside the full-width x slab
        j0 = pl.multiple_of(pl.program_id(0) * TN, 128)
        x_all = x_ref[...]

        # Fused graph conv + (scrambled reshape -> Linear):
        #   G_k    = [x_0; ...; x_{NB-1}] @ Kernel_k[:, tile]   (M = NB*rows_x)
        #   acc_nb += WB_k @ G_k[rows of batch nb]              (block-diag over T)
        for k in range(Ks):
            g = jnp.dot(x_all, ktaps[k][...], preferred_element_type=jnp.float32)
            for nb in range(NB):
                gb = g[nb * rows_x:(nb + 1) * rows_x, :]
                v = jnp.dot(wb_ref[k], gb, preferred_element_type=jnp.float32)
                if k == 0:
                    acc_ref[pl.ds(nb * rows_o, rows_o), :] = v
                else:
                    acc_ref[pl.ds(nb * rows_o, rows_o), :] += v

        # Epilogue: + Linear bias, ReLU, + module bias (reuses the resident x
        # tile; nothing re-read from HBM), lane-dense (TN >= 128) stores.
        for nb in range(NB):
            a = jax.nn.relu(acc_ref[pl.ds(nb * rows_o, rows_o), :] + lb_ref[...])
            xw = x_ref[pl.ds(nb * rows_x, rows_x), pl.ds(j0, TN)]
            if mode == "conv":        # c_in > c_out: 1x1-conv bias as a matmul
                bias = jnp.dot(extra_ref[...], xw, preferred_element_type=jnp.float32)
                o_ref[pl.ds(nb * rows_o, rows_o), :] = (a + bias).astype(o_ref.dtype)
            elif mode == "param":     # c_in < c_out: cat([x, param]) pass-through
                par = extra_ref[pl.ds(nb * rows_e, rows_e), :]
                o_ref[pl.ds(nb * rows_o, rows_x), :] = (a[:rows_x, :] + xw).astype(o_ref.dtype)
                o_ref[pl.ds(nb * rows_o + rows_x, rows_e), :] = (
                    a[rows_x:, :] + par).astype(o_ref.dtype)
            else:                     # c_in == c_out: bias is just x
                o_ref[pl.ds(nb * rows_o, rows_o), :] = (a + xw).astype(o_ref.dtype)

    return kernel


def spatio_cov_forward(x, kernel_mat, w_lin, b_lin, bias_layer, Ks, c_out,
                       use_bf16=False):
    """x: (B, c_in, T, N); kernel_mat: (N, Ks*N); w_lin: (c_out, Ks*c_in);
    b_lin: (c_out,); bias_layer: (c_out, c_in, 1, 1) conv weight if c_in > c_out,
    else (B, c_out - c_in, T, N) nn.Parameter.  Returns (B, c_out, T, N)."""
    B, c_in, T, N = x.shape
    # TODO(synk): n_node not a multiple of 128 would need node padding with
    # zero-padded kernel rows/columns.
    assert N % 128 == 0, "n_node must be a multiple of 128"
    rows_x, rows_o = c_in * T, c_out * T
    rows_e = (c_out - c_in) * T if c_out > c_in else 0
    mode = "conv" if c_in > c_out else ("param" if c_out > c_in else "param_eq")

    cdt = jnp.bfloat16 if use_bf16 else x.dtype
    TN, NB = _choose_tiling(B, N, Ks, (rows_x, rows_o, rows_e),
                            jnp.dtype(cdt).itemsize)
    n_tiles, n_bblk = N // TN, B // NB

    # ---- trace-time repacking: free reshapes + tiny weight tensors only ----
    x2 = x.reshape(B * rows_x, N).astype(cdt)          # rows = (batch, c, t)
    kmat = kernel_mat.astype(cdt)                      # raw; tiled by BlockSpec
    eye_t = jnp.eye(T, dtype=jnp.float32)
    w3 = w_lin.astype(jnp.float32).reshape(c_out, c_in, Ks)
    # WB[k, o*T+t, s*c_in+c] = W[o, c*Ks+k] * (t==s): realizes the module's
    # (B*c_in*T, Ks*N) -> (B*T, c_in, Ks, N) reshape scramble + Linear as matmuls.
    wb = jnp.einsum("ock,ts->kotsc", w3, eye_t).reshape(Ks, rows_o, rows_x)
    lb = jnp.repeat(b_lin.astype(jnp.float32), T).reshape(rows_o, 1)

    in_specs = [pl.BlockSpec((NB * rows_x, N), lambda j, bb: (bb, 0))]
    args = [x2]
    for k in range(Ks):   # per-tap view of the raw graph kernel; resident per tile
        in_specs.append(pl.BlockSpec((N, TN),
                                     lambda j, bb, kk=k: (0, kk * n_tiles + j)))
        args.append(kmat)
    in_specs += [pl.BlockSpec((Ks, rows_o, rows_x), lambda j, bb: (0, 0, 0)),
                 pl.BlockSpec((rows_o, 1), lambda j, bb: (0, 0))]
    args += [wb, lb]

    if mode == "conv":    # fold the 1x1-conv bias into a block-diag matmul weight
        wbias = jnp.einsum("oc,ts->otcs",
                           bias_layer[:, :, 0, 0].astype(jnp.float32),
                           eye_t).reshape(rows_o, rows_x).astype(cdt)
        in_specs.append(pl.BlockSpec((rows_o, rows_x), lambda j, bb: (0, 0)))
        args.append(wbias)
    elif mode == "param":  # only the extra parameter channels are streamed
        par2 = bias_layer.reshape(B * rows_e, N)
        in_specs.append(pl.BlockSpec((NB * rows_e, TN), lambda j, bb: (bb, j)))
        args.append(par2)

    out2 = pl.pallas_call(
        _make_kernel(Ks, NB, rows_x, rows_o, rows_e, TN, mode),
        out_shape=jax.ShapeDtypeStruct((B * rows_o, N), x.dtype),
        grid=(n_tiles, n_bblk),          # batch is the FAST axis: graph-kernel
        in_specs=in_specs,               # tiles stay VMEM-resident per node tile
        out_specs=pl.BlockSpec((NB * rows_o, TN), lambda j, bb: (bb, j)),
        scratch_shapes=[pltpu.VMEM((NB * rows_o, TN), jnp.float32)],
        compiler_params=pltpu.CompilerParams(
            dimension_semantics=("parallel", "parallel"),
            vmem_limit_bytes=48 * 1024 * 1024),
    )(*args)
    return out2.reshape(B, c_out, T, N)


def spatio_cov_reference(x, kernel_mat, w_lin, b_lin, bias_layer, Ks, c_out):
    """Literal JAX translation of the PyTorch forward."""
    B, c_in, T, N = x.shape
    hp = jax.lax.Precision.HIGHEST
    if c_in > c_out:
        bias = jnp.einsum("oc,bctn->botn", bias_layer[:, :, 0, 0], x, precision=hp)
    else:
        bias = jnp.concatenate([x, bias_layer], axis=1)
    xr = x.reshape(-1, N)
    xr = jnp.matmul(xr, kernel_mat, precision=hp)            # (B*c_in*T, Ks*N)
    xr = xr.reshape(-1, c_in, Ks, N)                          # (B*T, c_in, Ks, N)
    xr = jnp.transpose(xr, (0, 3, 1, 2)).reshape(-1, c_in * Ks)
    xr = jnp.matmul(xr, w_lin.T, precision=hp) + b_lin        # (B*T*N, c_out)
    xr = jnp.transpose(xr.reshape(-1, T, N, c_out), (0, 3, 1, 2))
    return jax.nn.relu(xr) + bias


if __name__ == "__main__":
    key = jax.random.PRNGKey(0)

    def run_case(B, c_in, T, N, Ks, c_out, case_key):
        ks = jax.random.split(case_key, 5)
        x = jax.random.normal(ks[0], (B, c_in, T, N), jnp.float32)
        kernel_mat = jax.random.normal(ks[1], (N, Ks * N), jnp.float32) / math.sqrt(N)
        bound = 1.0 / math.sqrt(Ks * c_in)
        w_lin = jax.random.uniform(ks[2], (c_out, Ks * c_in), jnp.float32, -bound, bound)
        b_lin = jax.random.uniform(ks[3], (c_out,), jnp.float32, -bound, bound)
        if c_in > c_out:
            bb = 1.0 / math.sqrt(c_in)
            bias_layer = jax.random.uniform(ks[4], (c_out, c_in, 1, 1),
                                            jnp.float32, -bb, bb)
        else:
            # The module initializes this nn.Parameter to zeros; use small random
            # values so the pass-through mapping is actually exercised.
            bias_layer = 0.1 * jax.random.normal(ks[4], (B, c_out - c_in, T, N),
                                                 jnp.float32)
        out = spatio_cov_forward(x, kernel_mat, w_lin, b_lin, bias_layer, Ks, c_out)
        out = jax.block_until_ready(out)
        ref = spatio_cov_reference(x, kernel_mat, w_lin, b_lin, bias_layer, Ks, c_out)
        np.testing.assert_allclose(np.asarray(out), np.asarray(ref),
                                   rtol=1e-4, atol=1e-4)

    # nn.Parameter bias branch (c_in < c_out), TN = N = 256, batch on the fast axis.
    run_case(B=2, c_in=4, T=16, N=256, Ks=3, c_out=8,
             case_key=jax.random.fold_in(key, 0))
    # 1x1-conv bias branch (c_in > c_out) folded into an in-kernel matmul.
    run_case(B=2, c_in=8, T=16, N=256, Ks=3, c_out=4,
             case_key=jax.random.fold_in(key, 1))
    # batch stacking: NB = 2 batches packed into the graph-conv M dimension.
    run_case(B=4, c_in=4, T=16, N=256, Ks=3, c_out=8,
             case_key=jax.random.fold_in(key, 2))
    # multiple node tiles: graph-kernel tiles stay resident across the batch sweep.
    run_case(B=2, c_in=8, T=16, N=1024, Ks=3, c_out=4,
             case_key=jax.random.fold_in(key, 3))

    print("KERNEL_OK")
</pallas_src>

<mosaic_0001>
module attributes {stable_mosaic.version = 11 : i64} {
  func.func @kernel(%arg0: i32, %arg1: i32, %arg2: memref<64x256xf32, #tpu.memory_space<vmem>>, %arg3: memref<256x256xf32, #tpu.memory_space<vmem>>, %arg4: memref<256x256xf32, #tpu.memory_space<vmem>>, %arg5: memref<256x256xf32, #tpu.memory_space<vmem>>, %arg6: memref<3x128x64xf32, #tpu.memory_space<vmem>>, %arg7: memref<128x1xf32, #tpu.memory_space<vmem>>, %arg8: memref<64x256xf32, #tpu.memory_space<vmem>>, %arg9: memref<128x256xf32, #tpu.memory_space<vmem>>, %arg10: memref<128x256xf32, #tpu.memory_space<vmem>>) attributes {dimension_semantics = [#tpu.dimension_semantics<parallel>, #tpu.dimension_semantics<parallel>], iteration_bounds = array<i64: 1, 2>, scalar_prefetch = 0 : i64, scratch_operands = 1 : i64, tpu.core_type = #tpu.core_type<tc>, window_params = [{transform_indices = @transform_0, window_bounds = array<i64: 64, 256>}, {transform_indices = @transform_1, window_bounds = array<i64: 256, 256>}, {transform_indices = @transform_2, window_bounds = array<i64: 256, 256>}, {transform_indices = @transform_3, window_bounds = array<i64: 256, 256>}, {pipeline_mode = #tpu.pipeline_mode<synchronous>, transform_indices = @transform_4, window_bounds = array<i64: 3, 128, 64>}, {pipeline_mode = #tpu.pipeline_mode<synchronous>, transform_indices = @transform_5, window_bounds = array<i64: 128, 1>}, {transform_indices = @transform_6, window_bounds = array<i64: 64, 256>}, {transform_indices = @transform_7, window_bounds = array<i64: 128, 256>}]} {
    %c256_i32 = arith.constant 256 : i32
    %0 = arith.muli %arg0, %c256_i32 : i32
    %1 = tpu.assume_multiple %0, 128 : i32
    %c0 = arith.constant 0 : index
    %c0_0 = arith.constant 0 : index
    %2 = vector.load %arg2[%c0, %c0_0] : memref<64x256xf32, #tpu.memory_space<vmem>>, vector<64x256xf32>
    %c0_1 = arith.constant 0 : index
    %c0_2 = arith.constant 0 : index
    %3 = vector.load %arg3[%c0_1, %c0_2] : memref<256x256xf32, #tpu.memory_space<vmem>>, vector<256x256xf32>
    %cst = arith.constant dense<0.000000e+00> : vector<64x256xf32>
    %4 = tpu.matmul %2, %3, %cst {dimension_numbers = #tpu.dot_dimension_numbers<[1], [0], [0], [1], [0, 0, 1, 1], [], []>} : vector<64x256xf32>, vector<256x256xf32>, vector<64x256xf32> -> vector<64x256xf32>
    %c0_3 = arith.constant 0 : index
    %c0_4 = arith.constant 0 : index
    %c0_5 = arith.constant 0 : index
    %5 = vector.load %arg6[%c0_3, %c0_4, %c0_5] : memref<3x128x64xf32, #tpu.memory_space<vmem>>, vector<1x128x64xf32>
    %6 = vector.shape_cast %5 : vector<1x128x64xf32> to vector<128x64xf32>
    %cst_6 = arith.constant dense<0.000000e+00> : vector<128x256xf32>
    %7 = tpu.matmul %6, %4, %cst_6 {dimension_numbers = #tpu.dot_dimension_numbers<[1], [0], [0], [1], [0, 0, 1, 1], [], []>} : vector<128x64xf32>, vector<64x256xf32>, vector<128x256xf32> -> vector<128x256xf32>
    %c0_7 = arith.constant 0 : index
    %c0_8 = arith.constant 0 : index
    %8 = vector.load %arg10[%c0_7, %c0_8] : memref<128x256xf32, #tpu.memory_space<vmem>>, vector<128x256xf32>
    tpu.vector_store %arg10[%c0_7, %c0_8], %7 {strides = array<i32>} : memref<128x256xf32, #tpu.memory_space<vmem>>, vector<128x256xf32>,
    %c0_9 = arith.constant 0 : index
    %c0_10 = arith.constant 0 : index
    %9 = vector.load %arg4[%c0_9, %c0_10] : memref<256x256xf32, #tpu.memory_space<vmem>>, vector<256x256xf32>
    %cst_11 = arith.constant dense<0.000000e+00> : vector<64x256xf32>
    %10 = tpu.matmul %2, %9, %cst_11 {dimension_numbers = #tpu.dot_dimension_numbers<[1], [0], [0], [1], [0, 0, 1, 1], [], []>} : vector<64x256xf32>, vector<256x256xf32>, vector<64x256xf32> -> vector<64x256xf32>
    %c1 = arith.constant 1 : index
    %c0_12 = arith.constant 0 : index
    %c0_13 = arith.constant 0 : index
    %11 = vector.load %arg6[%c1, %c0_12, %c0_13] : memref<3x128x64xf32, #tpu.memory_space<vmem>>, vector<1x128x64xf32>
    %12 = vector.shape_cast %11 : vector<1x128x64xf32> to vector<128x64xf32>
    %cst_14 = arith.constant dense<0.000000e+00> : vector<128x256xf32>
    %13 = tpu.matmul %12, %10, %cst_14 {dimension_numbers = #tpu.dot_dimension_numbers<[1], [0], [0], [1], [0, 0, 1, 1], [], []>} : vector<128x64xf32>, vector<64x256xf32>, vector<128x256xf32> -> vector<128x256xf32>
    %c0_15 = arith.constant 0 : index
    %c0_16 = arith.constant 0 : index
    %14 = vector.load %arg10[%c0_15, %c0_16] : memref<128x256xf32, #tpu.memory_space<vmem>>, vector<128x256xf32>
    %15 = arith.addf %14, %13 : vector<128x256xf32>
    %c0_17 = arith.constant 0 : index
    %c0_18 = arith.constant 0 : index
    %16 = vector.load %arg10[%c0_17, %c0_18] : memref<128x256xf32, #tpu.memory_space<vmem>>, vector<128x256xf32>
    tpu.vector_store %arg10[%c0_17, %c0_18], %15 {strides = array<i32>} : memref<128x256xf32, #tpu.memory_space<vmem>>, vector<128x256xf32>,
    %c0_19 = arith.constant 0 : index
    %c0_20 = arith.constant 0 : index
    %17 = vector.load %arg5[%c0_19, %c0_20] : memref<256x256xf32, #tpu.memory_space<vmem>>, vector<256x256xf32>
    %cst_21 = arith.constant dense<0.000000e+00> : vector<64x256xf32>
    %18 = tpu.matmul %2, %17, %cst_21 {dimension_numbers = #tpu.dot_dimension_numbers<[1], [0], [0], [1], [0, 0, 1, 1], [], []>} : vector<64x256xf32>, vector<256x256xf32>, vector<64x256xf32> -> vector<64x256xf32>
    %c2 = arith.constant 2 : index
    %c0_22 = arith.constant 0 : index
    %c0_23 = arith.constant 0 : index
    %19 = vector.load %arg6[%c2, %c0_22, %c0_23] : memref<3x128x64xf32, #tpu.memory_space<vmem>>, vector<1x128x64xf32>
    %20 = vector.shape_cast %19 : vector<1x128x64xf32> to vector<128x64xf32>
    %cst_24 = arith.constant dense<0.000000e+00> : vector<128x256xf32>
    %21 = tpu.matmul %20, %18, %cst_24 {dimension_numbers = #tpu.dot_dimension_numbers<[1], [0], [0], [1], [0, 0, 1, 1], [], []>} : vector<128x64xf32>, vector<64x256xf32>, vector<128x256xf32> -> vector<128x256xf32>
    %c0_25 = arith.constant 0 : index
    %c0_26 = arith.constant 0 : index
    %22 = vector.load %arg10[%c0_25, %c0_26] : memref<128x256xf32, #tpu.memory_space<vmem>>, vector<128x256xf32>
    %23 = arith.addf %22, %21 : vector<128x256xf32>
    %c0_27 = arith.constant 0 : index
    %c0_28 = arith.constant 0 : index
    %24 = vector.load %arg10[%c0_27, %c0_28] : memref<128x256xf32, #tpu.memory_space<vmem>>, vector<128x256xf32>
    tpu.vector_store %arg10[%c0_27, %c0_28], %23 {strides = array<i32>} : memref<128x256xf32, #tpu.memory_space<vmem>>, vector<128x256xf32>,
    %c0_29 = arith.constant 0 : index
    %c0_30 = arith.constant 0 : index
    %25 = vector.load %arg10[%c0_29, %c0_30] : memref<128x256xf32, #tpu.memory_space<vmem>>, vector<128x256xf32>
    %c0_31 = arith.constant 0 : index
    %c0_32 = arith.constant 0 : index
    %26 = vector.load %arg7[%c0_31, %c0_32] : memref<128x1xf32, #tpu.memory_space<vmem>>, vector<128x1xf32>
    %27 = vector.broadcast %26 : vector<128x1xf32> to vector<128x256xf32>
    %28 = arith.addf %25, %27 : vector<128x256xf32>
    %cst_33 = arith.constant 0.000000e+00 : f32
    %29 = vector.broadcast %cst_33 : f32 to vector<128x256xf32>
    %30 = arith.maximumf %28, %29 : vector<128x256xf32>
    %c0_34 = arith.constant 0 : index
    %31 = arith.index_cast %1 : i32 to index
    %32 = vector.load %arg2[%c0_34, %31] : memref<64x256xf32, #tpu.memory_space<vmem>>, vector<64x256xf32>
    %c0_35 = arith.constant 0 : index
    %c0_36 = arith.constant 0 : index
    %33 = vector.load %arg8[%c0_35, %c0_36] : memref<64x256xf32, #tpu.memory_space<vmem>>, vector<64x256xf32>
    %34 = vector.extract_strided_slice %30 {offsets = [0, 0], sizes = [64, 256], strides = [1, 1]} : vector<128x256xf32> to vector<64x256xf32>
    %35 = arith.addf %34, %32 : vector<64x256xf32>
    %c0_37 = arith.constant 0 : index
    %c0_38 = arith.constant 0 : index
    %36 = vector.load %arg9[%c0_37, %c0_38] : memref<128x256xf32, #tpu.memory_space<vmem>>, vector<64x256xf32>
    tpu.vector_store %arg9[%c0_37, %c0_38], %35 {strides = array<i32>} : memref<128x256xf32, #tpu.memory_space<vmem>>, vector<64x256xf32>,
    %37 = vector.extract_strided_slice %30 {offsets = [64, 0], sizes = [64, 256], strides = [1, 1]} : vector<128x256xf32> to vector<64x256xf32>
    %38 = arith.addf %37, %33 : vector<64x256xf32>
    %c64 = arith.constant 64 : index
    %c0_39 = arith.constant 0 : index
    %39 = vector.load %arg9[%c64, %c0_39] : memref<128x256xf32, #tpu.memory_space<vmem>>, vector<64x256xf32>
    tpu.vector_store %arg9[%c64, %c0_39], %38 {strides = array<i32>} : memref<128x256xf32, #tpu.memory_space<vmem>>, vector<64x256xf32>,
    return
  }
  func.func @transform_0(%arg0: i32, %arg1: i32) -> (i32, i32) {
    %c0_i32 = arith.constant 0 : i32
    %c0_i32_0 = arith.constant 0 : i32
    return %arg1, %c0_i32 : i32, i32
  }
  func.func @transform_1(%arg0: i32, %arg1: i32) -> (i32, i32) {
    %c0_i32 = arith.constant 0 : i32
    %0 = arith.addi %c0_i32, %arg0 : i32
    %c0_i32_0 = arith.constant 0 : i32
    %c0_i32_1 = arith.constant 0 : i32
    return %c0_i32_0, %0 : i32, i32
  }
  func.func @transform_2(%arg0: i32, %arg1: i32) -> (i32, i32) {
    %c1_i32 = arith.constant 1 : i32
    %0 = arith.addi %c1_i32, %arg0 : i32
    %c0_i32 = arith.constant 0 : i32
    %c0_i32_0 = arith.constant 0 : i32
    return %c0_i32, %0 : i32, i32
  }
  func.func @transform_3(%arg0: i32, %arg1: i32) -> (i32, i32) {
    %c2_i32 = arith.constant 2 : i32
    %0 = arith.addi %c2_i32, %arg0 : i32
    %c0_i32 = arith.constant 0 : i32
    %c0_i32_0 = arith.constant 0 : i32
    return %c0_i32, %0 : i32, i32
  }
  func.func @transform_4(%arg0: i32, %arg1: i32) -> (i32, i32, i32) {
    %c0_i32 = arith.constant 0 : i32
    %c0_i32_0 = arith.constant 0 : i32
    %c0_i32_1 = arith.constant 0 : i32
    %c0_i32_2 = arith.constant 0 : i32
    return %c0_i32, %c0_i32_0, %c0_i32_1 : i32, i32, i32
  }
  func.func @transform_5(%arg0: i32, %arg1: i32) -> (i32, i32) {
    %c0_i32 = arith.constant 0 : i32
    %c0_i32_0 = arith.constant 0 : i32
    %c0_i32_1 = arith.constant 0 : i32
    return %c0_i32, %c0_i32_0 : i32, i32
  }
  func.func @transform_6(%arg0: i32, %arg1: i32) -> (i32, i32) {
    %c0_i32 = arith.constant 0 : i32
    return %arg1, %arg0 : i32, i32
  }
  func.func @transform_7(%arg0: i32, %arg1: i32) -> (i32, i32) {
    %c0_i32 = arith.constant 0 : i32
    return %arg1, %arg0 : i32, i32
  }
}

</mosaic_0001>

<llo_original>
// kernel: tpu_custom_call.1
$region0: #{tpu_custom_call.1}
  #allocation0 [shape = 'u32[]', space=smem, size = 0x4, offset = 0x4, fixed_abs, tag = 'smem constant byte address 0x4 - core index']
  #allocation1 [shape = 'u32[72,128]{1,0:T(1,128)}', space=vmem, size = 0x9000, scoped, tag = 'internal scratch']
  #allocation2 [shape = 'f32[128,256]{1,0:T(8,128)}', space=vmem, size = 0x20000, scoped, tag = 'scratch operand']
  %s0 = inlined_call_operand.vmem [shape: f32[128,256], index: 0, kind: input, shape index: {}]
  %s1 = inlined_call_operand.hbm [shape: f32[256,768], index: 1, kind: input, shape index: {}]
  %s2 = inlined_call_operand.hbm [shape: f32[256,768], index: 2, kind: input, shape index: {}]
  %s3 = inlined_call_operand.hbm [shape: f32[256,768], index: 3, kind: input, shape index: {}]
  %s4 = inlined_call_operand.vmem [shape: f32[3,128,64], index: 4, kind: input, shape index: {}]
  %s5 = inlined_call_operand.vmem [shape: f32[128,1], index: 5, kind: input, shape index: {}]
  %s6 = inlined_call_operand.vmem [shape: f32[128,256], index: 6, kind: input, shape index: {}]
  %s7 = inlined_call_operand.hbm [shape: f32[256,256], index: 7, kind: output, shape index: {}]
  %s8 = sld [smem:[#allocation0]]
  $region73: #{tpu_custom_call.1} parent=0
    _
  %s10 = ssub.s32 1, %s8
  %s11 = scalar_select 0, %s10, %s8
  $region1: #{tpu_custom_call.1} parent=0
    #allocation3 [shape = 'u8[262144]{0}', space=vmem, size = 0x40000, scoped, tag = 'input window, operand 1, single buffered']
    #allocation4 [shape = 's32[2]{0}', space=sflag, size = 0x8, scoped, tag = 'scoped memory for tpu_custom_call.1']
    #allocation5 [shape = 's32[2]{0}', space=sflag, size = 0x8, scoped, tag = 'scoped memory for tpu_custom_call.1']
    #allocation6 [shape = 'u8[262144]{0}', space=vmem, size = 0x40000, scoped, tag = 'input window, operand 2, single buffered']
    #allocation7 [shape = 's32[1]{0}', space=sflag, size = 0x4, scoped, tag = 'scoped memory for tpu_custom_call.1']
    #allocation8 [shape = 'u8[262144]{0}', space=vmem, size = 0x40000, scoped, tag = 'input window, operand 3, single buffered']
    #allocation9 [shape = 'u8[262144]{0}', space=vmem, size = 0x40000, scoped, tag = 'output window, operand 0']
    %12 = vsyncpa [#allocation4], 0
    %13 = vsyncpa [#allocation7], 0
    %14 = vsyncpa [#allocation5], 0
    %s15 = scalar_lea.sflag [#allocation5], 1
    %16 = vsyncpa %s15, 0
    loop: start=0, step=1, limit=4
    $region2: #{tpu_custom_call.1} parent=1 // loop_pre_header
      _
    $region3: #{tpu_custom_call.1} parent=1 // loop_header
      %s18 = sphi 0, %s22
      %p19 = scmp.ge.s32.totalorder %s18, 4
      %s25 = sphi 0, %s37
      %s26 = sphi 0, %s33
      %s27 = sphi 0, %s25
      %s28 = sphi 0, %s26
      %s29 = sphi 0, %s27
      %s30 = sphi 0, %s28
      %s40 = sphi 0, %s42
      %s43 = sphi 0, %s40
      %s44 = sphi 0, %s43
      %s60 = sphi 0, %s44
      %s66 = sphi 0, %s68
      %s69 = sphi 0, %s66
      %s70 = sphi 0, %s69
      %s86 = sphi 0, %s70
      %s94 = sphi 0, %s96
      %s97 = sphi 0, %s94
      %s98 = sphi 0, %s97
      %s114 = sphi 0, %s98
      %s122 = sphi 0, %s124
      %s125 = sphi 0, %s122
      %s126 = sphi 0, %s125
      %s142 = sphi 0, %s126
      %s146 = sphi 0, %s146
      %s148 = sphi 0, %s146
      %s149 = sphi 0, %s148
      %s163 = sphi 0, %s149
      %s167 = sphi 0, %s167
      %s169 = sphi 0, %s167
      %s170 = sphi 0, %s169
      %s184 = sphi 0, %s170
      %s192 = sphi 0, %s194
      %s195 = sphi 0, %s192
      %s196 = sphi 0, %s195
      %s212 = sphi 0, %s196
      %s220 = sphi 0, %s222
      %s223 = sphi 0, %s220
      %s224 = sphi 0, %s223
      %s240 = sphi 0, %s224
    $region4: #{tpu_custom_call.1} parent=1 // loop_header_branch
      %21 = sbr.rel (%p19) target = $region8
    $region5: #{tpu_custom_call.1} parent=1 // loop_body
      %s23 = ssub.s32 %s18, 1
      %s24 = ssub.s32 %s18, 2
      %s31 = sadd.s32 1, %s26
      %p32 = scmp.ge.s32.totalorder %s31, 2
      %s33 = scalar_select %p32, 0, %s31
      %s34 = sadd.s32 1, %s25
      %s35 = scalar_select %p32, %s34, %s25
      %p36 = scmp.ge.s32.totalorder %s35, 1
      %s37 = scalar_select %p36, 0, %s35
      %s38 = ssub.s32 %s26, %s33
      %p39 = scmp.eq.s32.totalorder %s38, 0
      %s41 = sadd.s32 %s40, 1
      %s42 = scalar_select %p39, %s40, %s41
      %p45 = pneg %p39
      %p46 = scmp.eq.s32.totalorder %s18, 1
      %p47 = por %p45, %p46
      %p48 = scmp.ne.s32.totalorder %s40, %s43
      %p49 = scmp.eq.s32.totalorder %s18, 0
      %p50 = por %p48, %p49
      %p51 = scmp.ne.s32.totalorder %s40, %s43
      %p52 = scmp.eq.s32.totalorder %s23, 1
      %p53 = por %p51, %p52
      %p54 = scmp.ne.s32.totalorder %s43, %s44
      %p55 = scmp.eq.s32.totalorder %s23, 0
      %p56 = por %p54, %p55
      %p57 = scmp.ne.s32.totalorder %s43, %s44
      %p58 = scmp.eq.s32.totalorder %s24, 1
      %p59 = por %p57, %p58
      %p61 = scmp.ne.s32.totalorder %s44, %s60
      %p62 = scmp.eq.s32.totalorder %s24, 0
      %p63 = por %p61, %p62
      %s64 = ssub.s32 %s25, %s37
      %p65 = scmp.eq.s32.totalorder %s64, 0
      %s67 = sadd.s32 %s66, 1
      %s68 = scalar_select %p65, %s66, %s67
      %p71 = pneg %p65
      %p72 = scmp.eq.s32.totalorder %s18, 1
      %p73 = por %p71, %p72
      %p74 = scmp.ne.s32.totalorder %s66, %s69
      %p75 = scmp.eq.s32.totalorder %s18, 0
      %p76 = por %p74, %p75
      %p77 = scmp.ne.s32.totalorder %s66, %s69
      %p78 = scmp.eq.s32.totalorder %s23, 1
      %p79 = por %p77, %p78
      %p80 = scmp.ne.s32.totalorder %s69, %s70
      %p81 = scmp.eq.s32.totalorder %s23, 0
      %p82 = por %p80, %p81
      %p83 = scmp.ne.s32.totalorder %s69, %s70
      %p84 = scmp.eq.s32.totalorder %s24, 1
      %p85 = por %p83, %p84
      %p87 = scmp.ne.s32.totalorder %s70, %s86
      %p88 = scmp.eq.s32.totalorder %s24, 0
      %p89 = por %p87, %p88
      %s90 = sadd.s32 %s25, 1
      %s91 = sadd.s32 %s37, 1
      %s92 = ssub.s32 %s90, %s91
      %p93 = scmp.eq.s32.totalorder %s92, 0
      %s95 = sadd.s32 %s94, 1
      %s96 = scalar_select %p93, %s94, %s95
      %p99 = pneg %p93
      %p100 = scmp.eq.s32.totalorder %s18, 1
      %p101 = por %p99, %p100
      %p102 = scmp.ne.s32.totalorder %s94, %s97
      %p103 = scmp.eq.s32.totalorder %s18, 0
      %p104 = por %p102, %p103
      %p105 = scmp.ne.s32.totalorder %s94, %s97
      %p106 = scmp.eq.s32.totalorder %s23, 1
      %p107 = por %p105, %p106
      %p108 = scmp.ne.s32.totalorder %s97, %s98
      %p109 = scmp.eq.s32.totalorder %s23, 0
      %p110 = por %p108, %p109
      %p111 = scmp.ne.s32.totalorder %s97, %s98
      %p112 = scmp.eq.s32.totalorder %s24, 1
      %p113 = por %p111, %p112
      %p115 = scmp.ne.s32.totalorder %s98, %s114
      %p116 = scmp.eq.s32.totalorder %s24, 0
      %p117 = por %p115, %p116
      %s118 = sadd.s32 %s25, 2
      %s119 = sadd.s32 %s37, 2
      %s120 = ssub.s32 %s118, %s119
      %p121 = scmp.eq.s32.totalorder %s120, 0
      %s123 = sadd.s32 %s122, 1
      %s124 = scalar_select %p121, %s122, %s123
      %p127 = pneg %p121
      %p128 = scmp.eq.s32.totalorder %s18, 1
      %p129 = por %p127, %p128
      %p130 = scmp.ne.s32.totalorder %s122, %s125
      %p131 = scmp.eq.s32.totalorder %s18, 0
      %p132 = por %p130, %p131
      %p133 = scmp.ne.s32.totalorder %s122, %s125
      %p134 = scmp.eq.s32.totalorder %s23, 1
      %p135 = por %p133, %p134
      %p136 = scmp.ne.s32.totalorder %s125, %s126
      %p137 = scmp.eq.s32.totalorder %s23, 0
      %p138 = por %p136, %p137
      %p139 = scmp.ne.s32.totalorder %s125, %s126
      %p140 = scmp.eq.s32.totalorder %s24, 1
      %p141 = por %p139, %p140
      %p143 = scmp.ne.s32.totalorder %s126, %s142
      %p144 = scmp.eq.s32.totalorder %s24, 0
      %p145 = por %p143, %p144
      %s147 = sadd.s32 %s146, 1
      %p150 = scmp.eq.s32.totalorder %s18, 1
      %p151 = scmp.ne.s32.totalorder %s146, %s148
      %p152 = scmp.eq.s32.totalorder %s18, 0
      %p153 = por %p151, %p152
      %p154 = scmp.ne.s32.totalorder %s146, %s148
      %p155 = scmp.eq.s32.totalorder %s23, 1
      %p156 = por %p154, %p155
      %p157 = scmp.ne.s32.totalorder %s148, %s149
      %p158 = scmp.eq.s32.totalorder %s23, 0
      %p159 = por %p157, %p158
      %p160 = scmp.ne.s32.totalorder %s148, %s149
      %p161 = scmp.eq.s32.totalorder %s24, 1
      %p162 = por %p160, %p161
      %p164 = scmp.ne.s32.totalorder %s149, %s163
      %p165 = scmp.eq.s32.totalorder %s24, 0
      %p166 = por %p164, %p165
      %s168 = sadd.s32 %s167, 1
      %p171 = scmp.eq.s32.totalorder %s18, 1
      %p172 = scmp.ne.s32.totalorder %s167, %s169
      %p173 = scmp.eq.s32.totalorder %s18, 0
      %p174 = por %p172, %p173
      %p175 = scmp.ne.s32.totalorder %s167, %s169
      %p176 = scmp.eq.s32.totalorder %s23, 1
      %p177 = por %p175, %p176
      %p178 = scmp.ne.s32.totalorder %s169, %s170
      %p179 = scmp.eq.s32.totalorder %s23, 0
      %p180 = por %p178, %p179
      %p181 = scmp.ne.s32.totalorder %s169, %s170
      %p182 = scmp.eq.s32.totalorder %s24, 1
      %p183 = por %p181, %p182
      %p185 = scmp.ne.s32.totalorder %s170, %s184
      %p186 = scmp.eq.s32.totalorder %s24, 0
      %p187 = por %p185, %p186
      %s188 = ssub.s32 %s26, %s33
      %s189 = ssub.s32 %s25, %s37
      %s190 = sor.u32 %s188, %s189
      %p191 = scmp.eq.s32.totalorder %s190, 0
      %s193 = sadd.s32 %s192, 1
      %s194 = scalar_select %p191, %s192, %s193
      %p197 = pneg %p191
      %p198 = scmp.eq.s32.totalorder %s18, 1
      %p199 = por %p197, %p198
      %p200 = scmp.ne.s32.totalorder %s192, %s195
      %p201 = scmp.eq.s32.totalorder %s18, 0
      %p202 = por %p200, %p201
      %p203 = scmp.ne.s32.totalorder %s192, %s195
      %p204 = scmp.eq.s32.totalorder %s23, 1
      %p205 = por %p203, %p204
      %p206 = scmp.ne.s32.totalorder %s195, %s196
      %p207 = scmp.eq.s32.totalorder %s23, 0
      %p208 = por %p206, %p207
      %p209 = scmp.ne.s32.totalorder %s195, %s196
      %p210 = scmp.eq.s32.totalorder %s24, 1
      %p211 = por %p209, %p210
      %p213 = scmp.ne.s32.totalorder %s196, %s212
      %p214 = scmp.eq.s32.totalorder %s24, 0
      %p215 = por %p213, %p214
      %s216 = ssub.s32 %s26, %s33
      %s217 = ssub.s32 %s25, %s37
      %s218 = sor.u32 %s216, %s217
      %p219 = scmp.eq.s32.totalorder %s218, 0
      %s221 = sadd.s32 %s220, 1
      %s222 = scalar_select %p219, %s220, %s221
      %p225 = pneg %p219
      %p226 = scmp.eq.s32.totalorder %s18, 1
      %p227 = por %p225, %p226
      %p228 = scmp.ne.s32.totalorder %s220, %s223
      %p229 = scmp.eq.s32.totalorder %s18, 0
      %p230 = por %p228, %p229
      %p231 = scmp.ne.s32.totalorder %s220, %s223
      %p232 = scmp.eq.s32.totalorder %s23, 1
      %p233 = por %p231, %p232
      %p234 = scmp.ne.s32.totalorder %s223, %s224
      %p235 = scmp.eq.s32.totalorder %s23, 0
      %p236 = por %p234, %p235
      %p237 = scmp.ne.s32.totalorder %s223, %s224
      %p238 = scmp.eq.s32.totalorder %s24, 1
      %p239 = por %p237, %p238
      %p241 = scmp.ne.s32.totalorder %s224, %s240
      %p242 = scmp.eq.s32.totalorder %s24, 0
      %p243 = por %p241, %p242
      %p244 = scmp.le.s32.totalorder 1, %s18
      %p245 = scmp.lt.s32.totalorder %s18, 3
      %p246 = pnand %p244, %p245
      %p247 = pneg %p246
      // Predicated region
      $region9: #{tpu_custom_call.1} parent=5 // pred_check
        _
      $region10: #{tpu_custom_call.1} parent=5 // pred_check_branch
        %249 = sbr.rel (%p246) target = $region12
      $region11: #{tpu_custom_call.1} parent=5 // pred_region
        %s250 = ssub.s32 %s18, 1
        // Predicated region
        $region13: #{tpu_custom_call.1} parent=11 // pred_check
          %p251 = pneg %p82
        $region14: #{tpu_custom_call.1} parent=11 // pred_check_branch
          %253 = sbr.rel (%p251) target = $region16
        $region15: #{tpu_custom_call.1} parent=11 // pred_region
          %s254 = smul.u32 2, %s27
          %256 = vsyncadd [#allocation4], 0
          %s257 = smul.addr %s254, 8
          %s258 = scalar_lea.hbm %s1, %s257
          %s259 = sshll.u32 %s258, 4
          %s260 = int_to_ptr.hbm [resolvable:$true] %s259
          %s261 = sshll.u32 [#allocation3], 4
          %s262 = int_to_ptr.vmem [resolvable:$true] %s261
          %267 = dma.hbm_to_vmem [thread:$0]  %s260, 8192, %s262, [#allocation4], 768, 256, 16
        $region16: #{tpu_custom_call.1} parent=11 // pred_fallthru
          _
        // Predicated region
        $region17: #{tpu_custom_call.1} parent=11 // pred_check
          %p268 = pneg %p110
        $region18: #{tpu_custom_call.1} parent=11 // pred_check_branch
          %270 = sbr.rel (%p268) target = $region20
        $region19: #{tpu_custom_call.1} parent=11 // pred_region
          %s271 = sadd.s32 %s27, 1
          %s272 = smul.u32 2, %s271
          %274 = vsyncadd [#allocation7], 0
          %s275 = smul.addr %s272, 8
          %s276 = scalar_lea.hbm %s2, %s275
          %s277 = sshll.u32 %s276, 4
          %s278 = int_to_ptr.hbm [resolvable:$true] %s277
          %s279 = sshll.u32 [#allocation6], 4
          %s280 = int_to_ptr.vmem [resolvable:$true] %s279
          %285 = dma.hbm_to_vmem [thread:$0]  %s278, 8192, %s280, [#allocation7], 768, 256, 16
        $region20: #{tpu_custom_call.1} parent=11 // pred_fallthru
          _
        // Predicated region
        $region21: #{tpu_custom_call.1} parent=11 // pred_check
          %p286 = pneg %p138
        $region22: #{tpu_custom_call.1} parent=11 // pred_check_branch
          %288 = sbr.rel (%p286) target = $region24
        $region23: #{tpu_custom_call.1} parent=11 // pred_region
          %s289 = sadd.s32 %s27, 2
          %s290 = smul.u32 2, %s289
          %292 = vsyncadd [#allocation7], 0
          %s293 = smul.addr %s290, 8
          %s294 = scalar_lea.hbm %s3, %s293
          %s295 = sshll.u32 %s294, 4
          %s296 = int_to_ptr.hbm [resolvable:$true] %s295
          %s297 = sshll.u32 [#allocation8], 4
          %s298 = int_to_ptr.vmem [resolvable:$true] %s297
          %303 = dma.hbm_to_vmem [thread:$0]  %s296, 8192, %s298, [#allocation7], 768, 256, 16
        $region24: #{tpu_custom_call.1} parent=11 // pred_fallthru
          _
        // Predicated region
        $region25: #{tpu_custom_call.1} parent=11 // pred_check
          %p304 = pneg %p159
        $region26: #{tpu_custom_call.1} parent=11 // pred_check_branch
          %306 = sbr.rel (%p304) target = $region28
        $region27: #{tpu_custom_call.1} parent=11 // pred_region
          _
        $region28: #{tpu_custom_call.1} parent=11 // pred_fallthru
          _
        // Predicated region
        $region29: #{tpu_custom_call.1} parent=11 // pred_check
          %p307 = pneg %p180
        $region30: #{tpu_custom_call.1} parent=11 // pred_check_branch
          %309 = sbr.rel (%p307) target = $region32
        $region31: #{tpu_custom_call.1} parent=11 // pred_region
          _
        $region32: #{tpu_custom_call.1} parent=11 // pred_fallthru
          _
      $region12: #{tpu_custom_call.1} parent=5 // pred_fallthru
        _
      %p310 = scmp.lt.s32.totalorder %s18, 2
      // Predicated region
      $region33: #{tpu_custom_call.1} parent=5 // pred_check
        %p311 = pneg %p310
      $region34: #{tpu_custom_call.1} parent=5 // pred_check_branch
        %313 = sbr.rel (%p311) target = $region36
      $region35: #{tpu_custom_call.1} parent=5 // pred_region
        // Predicated region
        $region37: #{tpu_custom_call.1} parent=35 // pred_check
          %p314 = pneg %p50
        $region38: #{tpu_custom_call.1} parent=35 // pred_check_branch
          %316 = sbr.rel (%p314) target = $region40
        $region39: #{tpu_custom_call.1} parent=35 // pred_region
          %s317 = smul.u32 8, %s26
          %p318 = scmp.lt.s32.totalorder %s317, 15
          %s319 = scalar_select %p318, %s317, 15
          %s320 = smul.addr %s319, 2
          %s321 = smul.addr %s320, 8
          %s322 = scalar_lea.vmem %s0, %s321
          %s323 = smul.u32 8, %s26
        $region40: #{tpu_custom_call.1} parent=35 // pred_fallthru
          _
        // Predicated region
        $region41: #{tpu_custom_call.1} parent=35 // pred_check
          %p324 = pneg %p202
        $region42: #{tpu_custom_call.1} parent=35 // pred_check_branch
          %326 = sbr.rel (%p324) target = $region44
        $region43: #{tpu_custom_call.1} parent=35 // pred_region
          %s327 = smul.u32 8, %s26
          %s328 = smul.u32 2, %s25
          %p329 = scmp.lt.s32.totalorder %s327, 15
          %s330 = scalar_select %p329, %s327, 15
          %p331 = scmp.lt.s32.totalorder %s328, 1
          %s332 = scalar_select %p331, %s328, 1
          %s333 = smul.addr %s330, 2
          %s334 = sadd.s32 %s332, %s333
          %s335 = smul.addr %s334, 8
          %s336 = scalar_lea.vmem %s6, %s335
          %s337 = smul.u32 8, %s26
          %s338 = smul.u32 2, %s25
        $region44: #{tpu_custom_call.1} parent=35 // pred_fallthru
          _
      $region36: #{tpu_custom_call.1} parent=5 // pred_fallthru
        _
      %p339 = scmp.le.s32.totalorder 1, %s18
      %p340 = scmp.lt.s32.totalorder %s18, 3
      %p341 = pnand %p339, %p340
      %p342 = pneg %p341
      // Predicated region
      $region45: #{tpu_custom_call.1} parent=5 // pred_check
        _
      $region46: #{tpu_custom_call.1} parent=5 // pred_check_branch
        %344 = sbr.rel (%p341) target = $region48
      $region47: #{tpu_custom_call.1} parent=5 // pred_region
        %s345 = ssub.s32 %s18, 1
        // Predicated region
        $region49: #{tpu_custom_call.1} parent=47 // pred_check
          %p346 = pneg %p82
        $region50: #{tpu_custom_call.1} parent=47 // pred_check_branch
          %348 = sbr.rel (%p346) target = $region52
        $region51: #{tpu_custom_call.1} parent=47 // pred_region
          %350 = dma.done [#allocation4], 8192
        $region52: #{tpu_custom_call.1} parent=47 // pred_fallthru
          _
        // Predicated region
        $region53: #{tpu_custom_call.1} parent=47 // pred_check
          %p351 = pneg %p110
        $region54: #{tpu_custom_call.1} parent=47 // pred_check_branch
          %353 = sbr.rel (%p351) target = $region56
        $region55: #{tpu_custom_call.1} parent=47 // pred_region
          %355 = dma.done [#allocation7], 8192
        $region56: #{tpu_custom_call.1} parent=47 // pred_fallthru
          _
        // Predicated region
        $region57: #{tpu_custom_call.1} parent=47 // pred_check
          %p356 = pneg %p138
        $region58: #{tpu_custom_call.1} parent=47 // pred_check_branch
          %358 = sbr.rel (%p356) target = $region60
        $region59: #{tpu_custom_call.1} parent=47 // pred_region
          %360 = dma.done [#allocation7], 8192
        $region60: #{tpu_custom_call.1} parent=47 // pred_fallthru
          _
        %s361 = smul.u32 8, %s28
        %p362 = scmp.lt.s32.totalorder %s361, 15
        %s363 = scalar_select %p362, %s361, 15
        %s364 = smul.addr %s363, 2
        %s365 = smul.addr %s364, 8
        %s366 = scalar_lea.vmem %s0, %s365
        %p367 = pneg %p56
        %p368 = pneg %p53
        %p369 = pneg %p82
        %p370 = pneg %p79
        %p371 = pneg %p110
        %p372 = pneg %p107
        %p373 = pneg %p138
        %p374 = pneg %p135
        %p375 = pneg %p159
        %p376 = pneg %p156
        %p377 = pneg %p180
        %p378 = pneg %p177
        %s379 = smul.u32 8, %s28
        %s380 = smul.u32 2, %s27
        %p381 = scmp.lt.s32.totalorder %s379, 15
        %s382 = scalar_select %p381, %s379, 15
        %p383 = scmp.lt.s32.totalorder %s380, 1
        %s384 = scalar_select %p383, %s380, 1
        %s385 = smul.addr %s382, 2
        %s386 = sadd.s32 %s384, %s385
        %s387 = smul.addr %s386, 8
        %s388 = scalar_lea.vmem %s6, %s387
        %p389 = pneg %p208
        %p390 = pneg %p205
        %p391 = pneg %p236
        %p392 = pneg %p233
        %s393 = sand.u32 %s223, 1
        %s394 = scalar_lea.sflag [#allocation5], %s393
        %s395 = sand.u32 %s223, 1
        %s396 = smul.addr %s395, 256
        %s397 = scalar_lea.vmem [#allocation9], %s396
        %s398 = smul.u32 8, %s28
        %p399 = scmp.lt.s32.totalorder %s398, 15
        %s400 = scalar_select %p399, %s398, 15
        %s401 = smul.addr %s400, 2
        %s402 = smul.addr %s401, 8
        %s403 = scalar_lea.vmem %s0, %s402
        %s404 = smul.u32 8, %s28
        %s405 = smul.u32 2, %s27
        %s406 = sadd.s32 %s27, 1
        %s407 = smul.u32 2, %s406
        %s408 = sadd.s32 %s27, 2
        %s409 = smul.u32 2, %s408
        %s410 = smul.u32 8, %s28
        %s411 = smul.u32 2, %s27
        %p412 = scmp.lt.s32.totalorder %s410, 15
        %s413 = scalar_select %p412, %s410, 15
        %p414 = scmp.lt.s32.totalorder %s411, 1
        %s415 = scalar_select %p414, %s411, 1
        %s416 = smul.addr %s413, 2
        %s417 = sadd.s32 %s415, %s416
        %s418 = smul.addr %s417, 8
        %s419 = scalar_lea.vmem %s6, %s418
        %s420 = smul.u32 8, %s28
        %s421 = smul.u32 2, %s27
        %s422 = smul.u32 16, %s28
        %s423 = smul.u32 2, %s27
        %s424 = smul.u32 %s27, 256
        %v425 = vld [vmem:[%s403] sm:$0xff]
        %v426 = vld [vmem:[%s403 + $0x8] sm:$0xff]
        %v427 = vld [vmem:[%s403 + $0x10] sm:$0xff]
        %v428 = vld [vmem:[%s403 + $0x18] sm:$0xff]
        %v429 = vld [vmem:[%s403 + $0x20] sm:$0xff]
        %v430 = vld [vmem:[%s403 + $0x28] sm:$0xff]
        %v431 = vld [vmem:[%s403 + $0x30] sm:$0xff]
        %v432 = vld [vmem:[%s403 + $0x38] sm:$0xff]
        %v433 = vld [vmem:[%s403 + $0x40] sm:$0xff]
        %v434 = vld [vmem:[%s403 + $0x48] sm:$0xff]
        %v435 = vld [vmem:[%s403 + $0x50] sm:$0xff]
        %v436 = vld [vmem:[%s403 + $0x58] sm:$0xff]
        %v437 = vld [vmem:[%s403 + $0x60] sm:$0xff]
        %v438 = vld [vmem:[%s403 + $0x68] sm:$0xff]
        %v439 = vld [vmem:[%s403 + $0x70] sm:$0xff]
        %v440 = vld [vmem:[%s403 + $0x78] sm:$0xff]
        %v441 = vld [vmem:[#allocation3] sm:$0xff]
        %v442 = vld [vmem:[#allocation3 + $0x8] sm:$0xff]
        %v443 = vld [vmem:[#allocation3 + $0x10] sm:$0xff]
        %v444 = vld [vmem:[#allocation3 + $0x18] sm:$0xff]
        %v445 = vld [vmem:[#allocation3 + $0x20] sm:$0xff]
        %v446 = vld [vmem:[#allocation3 + $0x28] sm:$0xff]
        %v447 = vld [vmem:[#allocation3 + $0x30] sm:$0xff]
        %v448 = vld [vmem:[#allocation3 + $0x38] sm:$0xff]
        %v449 = vld [vmem:[#allocation3 + $0x40] sm:$0xff]
        %v450 = vld [vmem:[#allocation3 + $0x48] sm:$0xff]
        %v451 = vld [vmem:[#allocation3 + $0x50] sm:$0xff]
        %v452 = vld [vmem:[#allocation3 + $0x58] sm:$0xff]
        %v453 = vld [vmem:[#allocation3 + $0x60] sm:$0xff]
        %v454 = vld [vmem:[#allocation3 + $0x68] sm:$0xff]
        %v455 = vld [vmem:[#allocation3 + $0x70] sm:$0xff]
        %v456 = vld [vmem:[#allocation3 + $0x78] sm:$0xff]
        %v457 = vld [vmem:[#allocation3 + $0x80] sm:$0xff]
        %v458 = vld [vmem:[#allocation3 + $0x88] sm:$0xff]
        %v459 = vld [vmem:[#allocation3 + $0x90] sm:$0xff]
        %v460 = vld [vmem:[#allocation3 + $0x98] sm:$0xff]
        %v461 = vld [vmem:[#allocation3 + $0xa0] sm:$0xff]
        %v462 = vld [vmem:[#allocation3 + $0xa8] sm:$0xff]
        %v463 = vld [vmem:[#allocation3 + $0xb0] sm:$0xff]
        %v464 = vld [vmem:[#allocation3 + $0xb8] sm:$0xff]
        %v465 = vld [vmem:[#allocation3 + $0xc0] sm:$0xff]
        %v466 = vld [vmem:[#allocation3 + $0xc8] sm:$0xff]
        %v467 = vld [vmem:[#allocation3 + $0xd0] sm:$0xff]
        %v468 = vld [vmem:[#allocation3 + $0xd8] sm:$0xff]
        %v469 = vld [vmem:[#allocation3 + $0xe0] sm:$0xff]
        %v470 = vld [vmem:[#allocation3 + $0xe8] sm:$0xff]
        %v471 = vld [vmem:[#allocation3 + $0xf0] sm:$0xff]
        %v472 = vld [vmem:[#allocation3 + $0xf8] sm:$0xff]
        %v473 = vld [vmem:[#allocation3 + $0x100] sm:$0xff]
        %v474 = vld [vmem:[#allocation3 + $0x108] sm:$0xff]
        %v475 = vld [vmem:[#allocation3 + $0x110] sm:$0xff]
        %v476 = vld [vmem:[#allocation3 + $0x118] sm:$0xff]
        %v477 = vld [vmem:[#allocation3 + $0x120] sm:$0xff]
        %v478 = vld [vmem:[#allocation3 + $0x128] sm:$0xff]
        %v479 = vld [vmem:[#allocation3 + $0x130] sm:$0xff]
        %v480 = vld [vmem:[#allocation3 + $0x138] sm:$0xff]
        %v481 = vld [vmem:[#allocation3 + $0x140] sm:$0xff]
        %v482 = vld [vmem:[#allocation3 + $0x148] sm:$0xff]
        %v483 = vld [vmem:[#allocation3 + $0x150] sm:$0xff]
        %v484 = vld [vmem:[#allocation3 + $0x158] sm:$0xff]
        %v485 = vld [vmem:[#allocation3 + $0x160] sm:$0xff]
        %v486 = vld [vmem:[#allocation3 + $0x168] sm:$0xff]
        %v487 = vld [vmem:[#allocation3 + $0x170] sm:$0xff]
        %v488 = vld [vmem:[#allocation3 + $0x178] sm:$0xff]
        %v489 = vld [vmem:[#allocation3 + $0x180] sm:$0xff]
        %v490 = vld [vmem:[#allocation3 + $0x188] sm:$0xff]
        %v491 = vld [vmem:[#allocation3 + $0x190] sm:$0xff]
        %v492 = vld [vmem:[#allocation3 + $0x198] sm:$0xff]
        %v493 = vld [vmem:[#allocation3 + $0x1a0] sm:$0xff]
        %v494 = vld [vmem:[#allocation3 + $0x1a8] sm:$0xff]
        %v495 = vld [vmem:[#allocation3 + $0x1b0] sm:$0xff]
        %v496 = vld [vmem:[#allocation3 + $0x1b8] sm:$0xff]
        %v497 = vld [vmem:[#allocation3 + $0x1c0] sm:$0xff]
        %v498 = vld [vmem:[#allocation3 + $0x1c8] sm:$0xff]
        %v499 = vld [vmem:[#allocation3 + $0x1d0] sm:$0xff]
        %v500 = vld [vmem:[#allocation3 + $0x1d8] sm:$0xff]
        %v501 = vld [vmem:[#allocation3 + $0x1e0] sm:$0xff]
        %v502 = vld [vmem:[#allocation3 + $0x1e8] sm:$0xff]
        %v503 = vld [vmem:[#allocation3 + $0x1f0] sm:$0xff]
        %v504 = vld [vmem:[#allocation3 + $0x1f8] sm:$0xff]
        %505 = vmatpush.msra.mxu0 %v471
        %506 = vmatpush.msra.mxu0 %v469
        %507 = vmatpush.msra.mxu0 %v467
        %508 = vmatpush.msra.mxu0 %v465
        %509 = vmatpush.msra.mxu0 %v463
        %510 = vmatpush.msra.mxu0 %v461
        %511 = vmatpush.msra.mxu0 %v459
        %512 = vmatpush.msra.mxu0 %v457
        %513 = vmatpush.msra.mxu0 %v455
        %514 = vmatpush.msra.mxu0 %v453
        %515 = vmatpush.msra.mxu0 %v451
        %516 = vmatpush.msra.mxu0 %v449
        %517 = vmatpush.msra.mxu0 %v447
        %518 = vmatpush.msra.mxu0 %v445
        %519 = vmatpush.msra.mxu0 %v443
        %520 = vmatpush.msra.mxu0 %v441
        %521 = vmatmul.f32.gmra.mxu0 %v425
        %v522 = vpop.f32.mrf.mxu0
        %v523 = vadd.f32 0.0, %v522
        %524 = vmatmul.f32.gmra.mxu0 %v427
        %v525 = vpop.f32.mrf.mxu0
        %v526 = vadd.f32 0.0, %v525
        %527 = vmatmul.f32.gmra.mxu0 %v429
        %v528 = vpop.f32.mrf.mxu0
        %v529 = vadd.f32 0.0, %v528
        %530 = vmatmul.f32.gmra.mxu0 %v431
        %v531 = vpop.f32.mrf.mxu0
        %v532 = vadd.f32 0.0, %v531
        %533 = vmatmul.f32.gmra.mxu0 %v433
        %v534 = vpop.f32.mrf.mxu0
        %v535 = vadd.f32 0.0, %v534
        %536 = vmatmul.f32.gmra.mxu0 %v435
        %v537 = vpop.f32.mrf.mxu0
        %v538 = vadd.f32 0.0, %v537
        %539 = vmatmul.f32.gmra.mxu0 %v437
        %v540 = vpop.f32.mrf.mxu0
        %v541 = vadd.f32 0.0, %v540
        %542 = vmatmul.f32.gmra.mxu0 %v439
        %v543 = vpop.f32.mrf.mxu0
        %v544 = vadd.f32 0.0, %v543
        %545 = vdwg.mxu0
        %546 = vmatpush.msra.mxu0 %v503
        %547 = vmatpush.msra.mxu0 %v501
        %548 = vmatpush.msra.mxu0 %v499
        %549 = vmatpush.msra.mxu0 %v497
        %550 = vmatpush.msra.mxu0 %v495
        %551 = vmatpush.msra.mxu0 %v493
        %552 = vmatpush.msra.mxu0 %v491
        %553 = vmatpush.msra.mxu0 %v489
        %554 = vmatpush.msra.mxu0 %v487
        %555 = vmatpush.msra.mxu0 %v485
        %556 = vmatpush.msra.mxu0 %v483
        %557 = vmatpush.msra.mxu0 %v481
        %558 = vmatpush.msra.mxu0 %v479
        %559 = vmatpush.msra.mxu0 %v477
        %560 = vmatpush.msra.mxu0 %v475
        %561 = vmatpush.msra.mxu0 %v473
        %562 = vmatmul.f32.gmra.mxu0 %v426
        %v563 = vpop.f32.mrf.mxu0
        %v564 = vadd.f32 %v523, %v563
        %565 = vmatmul.f32.gmra.mxu0 %v428
        %v566 = vpop.f32.mrf.mxu0
        %v567 = vadd.f32 %v526, %v566
        %568 = vmatmul.f32.gmra.mxu0 %v430
        %v569 = vpop.f32.mrf.mxu0
        %v570 = vadd.f32 %v529, %v569
        %571 = vmatmul.f32.gmra.mxu0 %v432
        %v572 = vpop.f32.mrf.mxu0
        %v573 = vadd.f32 %v532, %v572
        %574 = vmatmul.f32.gmra.mxu0 %v434
        %v575 = vpop.f32.mrf.mxu0
        %v576 = vadd.f32 %v535, %v575
        %577 = vmatmul.f32.gmra.mxu0 %v436
        %v578 = vpop.f32.mrf.mxu0
        %v579 = vadd.f32 %v538, %v578
        %580 = vmatmul.f32.gmra.mxu0 %v438
        %v581 = vpop.f32.mrf.mxu0
        %v582 = vadd.f32 %v541, %v581
        %583 = vmatmul.f32.gmra.mxu0 %v440
        %v584 = vpop.f32.mrf.mxu0
        %v585 = vadd.f32 %v544, %v584
        %586 = vdwg.mxu0
        %587 = vmatpush.msra.mxu0 %v472
        %588 = vmatpush.msra.mxu0 %v470
        %589 = vmatpush.msra.mxu0 %v468
        %590 = vmatpush.msra.mxu0 %v466
        %591 = vmatpush.msra.mxu0 %v464
        %592 = vmatpush.msra.mxu0 %v462
        %593 = vmatpush.msra.mxu0 %v460
        %594 = vmatpush.msra.mxu0 %v458
        %595 = vmatpush.msra.mxu0 %v456
        %596 = vmatpush.msra.mxu0 %v454
        %597 = vmatpush.msra.mxu0 %v452
        %598 = vmatpush.msra.mxu0 %v450
        %599 = vmatpush.msra.mxu0 %v448
        %600 = vmatpush.msra.mxu0 %v446
        %601 = vmatpush.msra.mxu0 %v444
        %602 = vmatpush.msra.mxu0 %v442
        %603 = vmatmul.f32.gmra.mxu0 %v425
        %v604 = vpop.f32.mrf.mxu0
        %v605 = vadd.f32 0.0, %v604
        %606 = vmatmul.f32.gmra.mxu0 %v427
        %v607 = vpop.f32.mrf.mxu0
        %v608 = vadd.f32 0.0, %v607
        %609 = vmatmul.f32.gmra.mxu0 %v429
        %v610 = vpop.f32.mrf.mxu0
        %v611 = vadd.f32 0.0, %v610
        %612 = vmatmul.f32.gmra.mxu0 %v431
        %v613 = vpop.f32.mrf.mxu0
        %v614 = vadd.f32 0.0, %v613
        %615 = vmatmul.f32.gmra.mxu0 %v433
        %v616 = vpop.f32.mrf.mxu0
        %v617 = vadd.f32 0.0, %v616
        %618 = vmatmul.f32.gmra.mxu0 %v435
        %v619 = vpop.f32.mrf.mxu0
        %v620 = vadd.f32 0.0, %v619
        %621 = vmatmul.f32.gmra.mxu0 %v437
        %v622 = vpop.f32.mrf.mxu0
        %v623 = vadd.f32 0.0, %v622
        %624 = vmatmul.f32.gmra.mxu0 %v439
        %v625 = vpop.f32.mrf.mxu0
        %v626 = vadd.f32 0.0, %v625
        %627 = vdwg.mxu0
        %628 = vmatpush.msra.mxu0 %v504
        %629 = vmatpush.msra.mxu0 %v502
        %630 = vmatpush.msra.mxu0 %v500
        %631 = vmatpush.msra.mxu0 %v498
        %632 = vmatpush.msra.mxu0 %v496
        %633 = vmatpush.msra.mxu0 %v494
        %634 = vmatpush.msra.mxu0 %v492
        %635 = vmatpush.msra.mxu0 %v490
        %636 = vmatpush.msra.mxu0 %v488
        %637 = vmatpush.msra.mxu0 %v486
        %638 = vmatpush.msra.mxu0 %v484
        %639 = vmatpush.msra.mxu0 %v482
        %640 = vmatpush.msra.mxu0 %v480
        %641 = vmatpush.msra.mxu0 %v478
        %642 = vmatpush.msra.mxu0 %v476
        %643 = vmatpush.msra.mxu0 %v474
        %644 = vmatmul.f32.gmra.mxu0 %v426
        %v645 = vpop.f32.mrf.mxu0
        %v646 = vadd.f32 %v605, %v645
        %647 = vmatmul.f32.gmra.mxu0 %v428
        %v648 = vpop.f32.mrf.mxu0
        %v649 = vadd.f32 %v608, %v648
        %650 = vmatmul.f32.gmra.mxu0 %v430
        %v651 = vpop.f32.mrf.mxu0
        %v652 = vadd.f32 %v611, %v651
        %653 = vmatmul.f32.gmra.mxu0 %v432
        %v654 = vpop.f32.mrf.mxu0
        %v655 = vadd.f32 %v614, %v654
        %656 = vmatmul.f32.gmra.mxu0 %v434
        %v657 = vpop.f32.mrf.mxu0
        %v658 = vadd.f32 %v617, %v657
        %659 = vmatmul.f32.gmra.mxu0 %v436
        %v660 = vpop.f32.mrf.mxu0
        %v661 = vadd.f32 %v620, %v660
        %662 = vmatmul.f32.gmra.mxu0 %v438
        %v663 = vpop.f32.mrf.mxu0
        %v664 = vadd.f32 %v623, %v663
        %665 = vmatmul.f32.gmra.mxu0 %v440
        %v666 = vpop.f32.mrf.mxu0
        %v667 = vadd.f32 %v626, %v666
        %668 = vdwg.mxu0
        %v669 = vld [vmem:[%s4] sm:$0xff]
        %v670 = vld [vmem:[%s4 + $0x8] sm:$0xff]
        %v671 = vld [vmem:[%s4 + $0x10] sm:$0xff]
        %v672 = vld [vmem:[%s4 + $0x18] sm:$0xff]
        %v673 = vld [vmem:[%s4 + $0x20] sm:$0xff]
        %v674 = vld [vmem:[%s4 + $0x28] sm:$0xff]
        %v675 = vld [vmem:[%s4 + $0x30] sm:$0xff]
        %v676 = vld [vmem:[%s4 + $0x38] sm:$0xff]
        %v677 = vld [vmem:[%s4 + $0x40] sm:$0xff]
        %v678 = vld [vmem:[%s4 + $0x48] sm:$0xff]
        %v679 = vld [vmem:[%s4 + $0x50] sm:$0xff]
        %v680 = vld [vmem:[%s4 + $0x58] sm:$0xff]
        %v681 = vld [vmem:[%s4 + $0x60] sm:$0xff]
        %v682 = vld [vmem:[%s4 + $0x68] sm:$0xff]
        %v683 = vld [vmem:[%s4 + $0x70] sm:$0xff]
        %v684 = vld [vmem:[%s4 + $0x78] sm:$0xff]
        %vm685 = vcmask 523264
        %v687 = vsel %vm685, %v669, 0
        %v690 = vsel %vm685, %v670, 0
        %v693 = vsel %vm685, %v671, 0
        %v696 = vsel %vm685, %v672, 0
        %v699 = vsel %vm685, %v673, 0
        %v702 = vsel %vm685, %v674, 0
        %v705 = vsel %vm685, %v675, 0
        %v708 = vsel %vm685, %v676, 0
        %v711 = vsel %vm685, %v677, 0
        %v714 = vsel %vm685, %v678, 0
        %v717 = vsel %vm685, %v679, 0
        %v720 = vsel %vm685, %v680, 0
        %v723 = vsel %vm685, %v681, 0
        %v726 = vsel %vm685, %v682, 0
        %v729 = vsel %vm685, %v683, 0
        %v732 = vsel %vm685, %v684, 0
        %734 = vmatpush.msra.mxu0 0.0
        %735 = vmatpush.msra.mxu0 0.0
        %736 = vmatpush.msra.mxu0 0.0
        %737 = vmatpush.msra.mxu0 0.0
        %738 = vmatpush.msra.mxu0 0.0
        %739 = vmatpush.msra.mxu0 0.0
        %740 = vmatpush.msra.mxu0 0.0
        %741 = vmatpush.msra.mxu0 0.0
        %742 = vmatpush.msra.mxu0 %v585
        %743 = vmatpush.msra.mxu0 %v582
        %744 = vmatpush.msra.mxu0 %v579
        %745 = vmatpush.msra.mxu0 %v576
        %746 = vmatpush.msra.mxu0 %v573
        %747 = vmatpush.msra.mxu0 %v570
        %748 = vmatpush.msra.mxu0 %v567
        %749 = vmatpush.msra.mxu0 %v564
        %750 = vmatmul.f32.gmra.mxu0 %v687
        %v751 = vpop.f32.mrf.mxu0
        %v752 = vadd.f32 0.0, %v751
        %753 = vmatmul.f32.gmra.mxu0 %v690
        %v754 = vpop.f32.mrf.mxu0
        %v755 = vadd.f32 0.0, %v754
        %756 = vmatmul.f32.gmra.mxu0 %v693
        %v757 = vpop.f32.mrf.mxu0
        %v758 = vadd.f32 0.0, %v757
        %759 = vmatmul.f32.gmra.mxu0 %v696
        %v760 = vpop.f32.mrf.mxu0
        %v761 = vadd.f32 0.0, %v760
        %762 = vmatmul.f32.gmra.mxu0 %v699
        %v763 = vpop.f32.mrf.mxu0
        %v764 = vadd.f32 0.0, %v763
        %765 = vmatmul.f32.gmra.mxu0 %v702
        %v766 = vpop.f32.mrf.mxu0
        %v767 = vadd.f32 0.0, %v766
        %768 = vmatmul.f32.gmra.mxu0 %v705
        %v769 = vpop.f32.mrf.mxu0
        %v770 = vadd.f32 0.0, %v769
        %771 = vmatmul.f32.gmra.mxu0 %v708
        %v772 = vpop.f32.mrf.mxu0
        %v773 = vadd.f32 0.0, %v772
        %774 = vmatmul.f32.gmra.mxu0 %v711
        %v775 = vpop.f32.mrf.mxu0
        %v776 = vadd.f32 0.0, %v775
        %777 = vmatmul.f32.gmra.mxu0 %v714
        %v778 = vpop.f32.mrf.mxu0
        %v779 = vadd.f32 0.0, %v778
        %780 = vmatmul.f32.gmra.mxu0 %v717
        %v781 = vpop.f32.mrf.mxu0
        %v782 = vadd.f32 0.0, %v781
        %783 = vmatmul.f32.gmra.mxu0 %v720
        %v784 = vpop.f32.mrf.mxu0
        %v785 = vadd.f32 0.0, %v784
        %786 = vmatmul.f32.gmra.mxu0 %v723
        %v787 = vpop.f32.mrf.mxu0
        %v788 = vadd.f32 0.0, %v787
        %789 = vmatmul.f32.gmra.mxu0 %v726
        %v790 = vpop.f32.mrf.mxu0
        %v791 = vadd.f32 0.0, %v790
        %792 = vmatmul.f32.gmra.mxu0 %v729
        %v793 = vpop.f32.mrf.mxu0
        %v794 = vadd.f32 0.0, %v793
        %795 = vmatmul.f32.gmra.mxu0 %v732
        %v796 = vpop.f32.mrf.mxu0
        %v797 = vadd.f32 0.0, %v796
        %798 = vdwg.mxu0
        %799 = vmatpush.msra.mxu0 0.0
        %800 = vmatpush.msra.mxu0 0.0
        %801 = vmatpush.msra.mxu0 0.0
        %802 = vmatpush.msra.mxu0 0.0
        %803 = vmatpush.msra.mxu0 0.0
        %804 = vmatpush.msra.mxu0 0.0
        %805 = vmatpush.msra.mxu0 0.0
        %806 = vmatpush.msra.mxu0 0.0
        %807 = vmatpush.msra.mxu0 %v667
        %808 = vmatpush.msra.mxu0 %v664
        %809 = vmatpush.msra.mxu0 %v661
        %810 = vmatpush.msra.mxu0 %v658
        %811 = vmatpush.msra.mxu0 %v655
        %812 = vmatpush.msra.mxu0 %v652
        %813 = vmatpush.msra.mxu0 %v649
        %814 = vmatpush.msra.mxu0 %v646
        %815 = vmatmul.f32.gmra.mxu0 %v687
        %v816 = vpop.f32.mrf.mxu0
        %v817 = vadd.f32 0.0, %v816
        %818 = vmatmul.f32.gmra.mxu0 %v690
        %v819 = vpop.f32.mrf.mxu0
        %v820 = vadd.f32 0.0, %v819
        %821 = vmatmul.f32.gmra.mxu0 %v693
        %v822 = vpop.f32.mrf.mxu0
        %v823 = vadd.f32 0.0, %v822
        %824 = vmatmul.f32.gmra.mxu0 %v696
        %v825 = vpop.f32.mrf.mxu0
        %v826 = vadd.f32 0.0, %v825
        %827 = vmatmul.f32.gmra.mxu0 %v699
        %v828 = vpop.f32.mrf.mxu0
        %v829 = vadd.f32 0.0, %v828
        %830 = vmatmul.f32.gmra.mxu0 %v702
        %v831 = vpop.f32.mrf.mxu0
        %v832 = vadd.f32 0.0, %v831
        %833 = vmatmul.f32.gmra.mxu0 %v705
        %v834 = vpop.f32.mrf.mxu0
        %v835 = vadd.f32 0.0, %v834
        %836 = vmatmul.f32.gmra.mxu0 %v708
        %v837 = vpop.f32.mrf.mxu0
        %v838 = vadd.f32 0.0, %v837
        %839 = vmatmul.f32.gmra.mxu0 %v711
        %v840 = vpop.f32.mrf.mxu0
        %v841 = vadd.f32 0.0, %v840
        %842 = vmatmul.f32.gmra.mxu0 %v714
        %v843 = vpop.f32.mrf.mxu0
        %v844 = vadd.f32 0.0, %v843
        %845 = vmatmul.f32.gmra.mxu0 %v717
        %v846 = vpop.f32.mrf.mxu0
        %v847 = vadd.f32 0.0, %v846
        %848 = vmatmul.f32.gmra.mxu0 %v720
        %v849 = vpop.f32.mrf.mxu0
        %v850 = vadd.f32 0.0, %v849
        %851 = vmatmul.f32.gmra.mxu0 %v723
        %v852 = vpop.f32.mrf.mxu0
        %v853 = vadd.f32 0.0, %v852
        %854 = vmatmul.f32.gmra.mxu0 %v726
        %v855 = vpop.f32.mrf.mxu0
        %v856 = vadd.f32 0.0, %v855
        %857 = vmatmul.f32.gmra.mxu0 %v729
        %v858 = vpop.f32.mrf.mxu0
        %v859 = vadd.f32 0.0, %v858
        %860 = vmatmul.f32.gmra.mxu0 %v732
        %v861 = vpop.f32.mrf.mxu0
        %v862 = vadd.f32 0.0, %v861
        %863 = vdwg.mxu0
        %864 = vst [vmem:[#allocation2] sm:$0xff] %v752
        %865 = vst [vmem:[#allocation2 + $0x8] sm:$0xff] %v817
        %866 = vst [vmem:[#allocation2 + $0x10] sm:$0xff] %v755
        %867 = vst [vmem:[#allocation2 + $0x18] sm:$0xff] %v820
        %868 = vst [vmem:[#allocation2 + $0x20] sm:$0xff] %v758
        %869 = vst [vmem:[#allocation2 + $0x28] sm:$0xff] %v823
        %870 = vst [vmem:[#allocation2 + $0x30] sm:$0xff] %v761
        %871 = vst [vmem:[#allocation2 + $0x38] sm:$0xff] %v826
        %872 = vst [vmem:[#allocation2 + $0x40] sm:$0xff] %v764
        %873 = vst [vmem:[#allocation2 + $0x48] sm:$0xff] %v829
        %874 = vst [vmem:[#allocation2 + $0x50] sm:$0xff] %v767
        %875 = vst [vmem:[#allocation2 + $0x58] sm:$0xff] %v832
        %876 = vst [vmem:[#allocation2 + $0x60] sm:$0xff] %v770
        %877 = vst [vmem:[#allocation2 + $0x68] sm:$0xff] %v835
        %878 = vst [vmem:[#allocation2 + $0x70] sm:$0xff] %v773
        %879 = vst [vmem:[#allocation2 + $0x78] sm:$0xff] %v838
        %880 = vst [vmem:[#allocation2 + $0x80] sm:$0xff] %v776
        %881 = vst [vmem:[#allocation2 + $0x88] sm:$0xff] %v841
        %882 = vst [vmem:[#allocation2 + $0x90] sm:$0xff] %v779
        %883 = vst [vmem:[#allocation2 + $0x98] sm:$0xff] %v844
        %884 = vst [vmem:[#allocation2 + $0xa0] sm:$0xff] %v782
        %885 = vst [vmem:[#allocation2 + $0xa8] sm:$0xff] %v847
        %886 = vst [vmem:[#allocation2 + $0xb0] sm:$0xff] %v785
        %887 = vst [vmem:[#allocation2 + $0xb8] sm:$0xff] %v850
        %888 = vst [vmem:[#allocation2 + $0xc0] sm:$0xff] %v788
        %889 = vst [vmem:[#allocation2 + $0xc8] sm:$0xff] %v853
        %890 = vst [vmem:[#allocation2 + $0xd0] sm:$0xff] %v791
        %891 = vst [vmem:[#allocation2 + $0xd8] sm:$0xff] %v856
        %892 = vst [vmem:[#allocation2 + $0xe0] sm:$0xff] %v794
        %893 = vst [vmem:[#allocation2 + $0xe8] sm:$0xff] %v859
        %894 = vst [vmem:[#allocation2 + $0xf0] sm:$0xff] %v797
        %895 = vst [vmem:[#allocation2 + $0xf8] sm:$0xff] %v862
        %v896 = vld [vmem:[#allocation6] sm:$0xff]
        %v897 = vld [vmem:[#allocation6 + $0x8] sm:$0xff]
        %v898 = vld [vmem:[#allocation6 + $0x10] sm:$0xff]
        %v899 = vld [vmem:[#allocation6 + $0x18] sm:$0xff]
        %v900 = vld [vmem:[#allocation6 + $0x20] sm:$0xff]
        %v901 = vld [vmem:[#allocation6 + $0x28] sm:$0xff]
        %v902 = vld [vmem:[#allocation6 + $0x30] sm:$0xff]
        %v903 = vld [vmem:[#allocation6 + $0x38] sm:$0xff]
        %v904 = vld [vmem:[#allocation6 + $0x40] sm:$0xff]
        %v905 = vld [vmem:[#allocation6 + $0x48] sm:$0xff]
        %v906 = vld [vmem:[#allocation6 + $0x50] sm:$0xff]
        %v907 = vld [vmem:[#allocation6 + $0x58] sm:$0xff]
        %v908 = vld [vmem:[#allocation6 + $0x60] sm:$0xff]
        %v909 = vld [vmem:[#allocation6 + $0x68] sm:$0xff]
        %v910 = vld [vmem:[#allocation6 + $0x70] sm:$0xff]
        %v911 = vld [vmem:[#allocation6 + $0x78] sm:$0xff]
        %v912 = vld [vmem:[#allocation6 + $0x80] sm:$0xff]
        %v913 = vld [vmem:[#allocation6 + $0x88] sm:$0xff]
        %v914 = vld [vmem:[#allocation6 + $0x90] sm:$0xff]
        %v915 = vld [vmem:[#allocation6 + $0x98] sm:$0xff]
        %v916 = vld [vmem:[#allocation6 + $0xa0] sm:$0xff]
        %v917 = vld [vmem:[#allocation6 + $0xa8] sm:$0xff]
        %v918 = vld [vmem:[#allocation6 + $0xb0] sm:$0xff]
        %v919 = vld [vmem:[#allocation6 + $0xb8] sm:$0xff]
        %v920 = vld [vmem:[#allocation6 + $0xc0] sm:$0xff]
        %v921 = vld [vmem:[#allocation6 + $0xc8] sm:$0xff]
        %v922 = vld [vmem:[#allocation6 + $0xd0] sm:$0xff]
        %v923 = vld [vmem:[#allocation6 + $0xd8] sm:$0xff]
        %v924 = vld [vmem:[#allocation6 + $0xe0] sm:$0xff]
        %v925 = vld [vmem:[#allocation6 + $0xe8] sm:$0xff]
        %v926 = vld [vmem:[#allocation6 + $0xf0] sm:$0xff]
        %v927 = vld [vmem:[#allocation6 + $0xf8] sm:$0xff]
        %v928 = vld [vmem:[#allocation6 + $0x100] sm:$0xff]
        %v929 = vld [vmem:[#allocation6 + $0x108] sm:$0xff]
        %v930 = vld [vmem:[#allocation6 + $0x110] sm:$0xff]
        %v931 = vld [vmem:[#allocation6 + $0x118] sm:$0xff]
        %v932 = vld [vmem:[#allocation6 + $0x120] sm:$0xff]
        %v933 = vld [vmem:[#allocation6 + $0x128] sm:$0xff]
        %v934 = vld [vmem:[#allocation6 + $0x130] sm:$0xff]
        %v935 = vld [vmem:[#allocation6 + $0x138] sm:$0xff]
        %v936 = vld [vmem:[#allocation6 + $0x140] sm:$0xff]
        %v937 = vld [vmem:[#allocation6 + $0x148] sm:$0xff]
        %v938 = vld [vmem:[#allocation6 + $0x150] sm:$0xff]
        %v939 = vld [vmem:[#allocation6 + $0x158] sm:$0xff]
        %v940 = vld [vmem:[#allocation6 + $0x160] sm:$0xff]
        %v941 = vld [vmem:[#allocation6 + $0x168] sm:$0xff]
        %v942 = vld [vmem:[#allocation6 + $0x170] sm:$0xff]
        %v943 = vld [vmem:[#allocation6 + $0x178] sm:$0xff]
        %v944 = vld [vmem:[#allocation6 + $0x180] sm:$0xff]
        %v945 = vld [vmem:[#allocation6 + $0x188] sm:$0xff]
        %v946 = vld [vmem:[#allocation6 + $0x190] sm:$0xff]
        %v947 = vld [vmem:[#allocation6 + $0x198] sm:$0xff]
        %v948 = vld [vmem:[#allocation6 + $0x1a0] sm:$0xff]
        %v949 = vld [vmem:[#allocation6 + $0x1a8] sm:$0xff]
        %v950 = vld [vmem:[#allocation6 + $0x1b0] sm:$0xff]
        %v951 = vld [vmem:[#allocation6 + $0x1b8] sm:$0xff]
        %v952 = vld [vmem:[#allocation6 + $0x1c0] sm:$0xff]
        %v953 = vld [vmem:[#allocation6 + $0x1c8] sm:$0xff]
        %v954 = vld [vmem:[#allocation6 + $0x1d0] sm:$0xff]
        %v955 = vld [vmem:[#allocation6 + $0x1d8] sm:$0xff]
        %v956 = vld [vmem:[#allocation6 + $0x1e0] sm:$0xff]
        %v957 = vld [vmem:[#allocation6 + $0x1e8] sm:$0xff]
        %v958 = vld [vmem:[#allocation6 + $0x1f0] sm:$0xff]
        %v959 = vld [vmem:[#allocation6 + $0x1f8] sm:$0xff]
        %960 = vmatpush.msra.mxu0 %v926
        %961 = vmatpush.msra.mxu0 %v924
        %962 = vmatpush.msra.mxu0 %v922
        %963 = vmatpush.msra.mxu0 %v920
        %964 = vmatpush.msra.mxu0 %v918
        %965 = vmatpush.msra.mxu0 %v916
        %966 = vmatpush.msra.mxu0 %v914
        %967 = vmatpush.msra.mxu0 %v912
        %968 = vmatpush.msra.mxu0 %v910
        %969 = vmatpush.msra.mxu0 %v908
        %970 = vmatpush.msra.mxu0 %v906
        %971 = vmatpush.msra.mxu0 %v904
        %972 = vmatpush.msra.mxu0 %v902
        %973 = vmatpush.msra.mxu0 %v900
        %974 = vmatpush.msra.mxu0 %v898
        %975 = vmatpush.msra.mxu0 %v896
        %976 = vmatmul.f32.gmra.mxu0 %v425
        %v977 = vpop.f32.mrf.mxu0
        %v978 = vadd.f32 0.0, %v977
        %979 = vmatmul.f32.gmra.mxu0 %v427
        %v980 = vpop.f32.mrf.mxu0
        %v981 = vadd.f32 0.0, %v980
        %982 = vmatmul.f32.gmra.mxu0 %v429
        %v983 = vpop.f32.mrf.mxu0
        %v984 = vadd.f32 0.0, %v983
        %985 = vmatmul.f32.gmra.mxu0 %v431
        %v986 = vpop.f32.mrf.mxu0
        %v987 = vadd.f32 0.0, %v986
        %988 = vmatmul.f32.gmra.mxu0 %v433
        %v989 = vpop.f32.mrf.mxu0
        %v990 = vadd.f32 0.0, %v989
        %991 = vmatmul.f32.gmra.mxu0 %v435
        %v992 = vpop.f32.mrf.mxu0
        %v993 = vadd.f32 0.0, %v992
        %994 = vmatmul.f32.gmra.mxu0 %v437
        %v995 = vpop.f32.mrf.mxu0
        %v996 = vadd.f32 0.0, %v995
        %997 = vmatmul.f32.gmra.mxu0 %v439
        %v998 = vpop.f32.mrf.mxu0
        %v999 = vadd.f32 0.0, %v998
        %1000 = vdwg.mxu0
        %1001 = vmatpush.msra.mxu0 %v958
        %1002 = vmatpush.msra.mxu0 %v956
        %1003 = vmatpush.msra.mxu0 %v954
        %1004 = vmatpush.msra.mxu0 %v952
        %1005 = vmatpush.msra.mxu0 %v950
        %1006 = vmatpush.msra.mxu0 %v948
        %1007 = vmatpush.msra.mxu0 %v946
        %1008 = vmatpush.msra.mxu0 %v944
        %1009 = vmatpush.msra.mxu0 %v942
        %1010 = vmatpush.msra.mxu0 %v940
        %1011 = vmatpush.msra.mxu0 %v938
        %1012 = vmatpush.msra.mxu0 %v936
        %1013 = vmatpush.msra.mxu0 %v934
        %1014 = vmatpush.msra.mxu0 %v932
        %1015 = vmatpush.msra.mxu0 %v930
        %1016 = vmatpush.msra.mxu0 %v928
        %1017 = vmatmul.f32.gmra.mxu0 %v426
        %v1018 = vpop.f32.mrf.mxu0
        %v1019 = vadd.f32 %v978, %v1018
        %1020 = vmatmul.f32.gmra.mxu0 %v428
        %v1021 = vpop.f32.mrf.mxu0
        %v1022 = vadd.f32 %v981, %v1021
        %1023 = vmatmul.f32.gmra.mxu0 %v430
        %v1024 = vpop.f32.mrf.mxu0
        %v1025 = vadd.f32 %v984, %v1024
        %1026 = vmatmul.f32.gmra.mxu0 %v432
        %v1027 = vpop.f32.mrf.mxu0
        %v1028 = vadd.f32 %v987, %v1027
        %1029 = vmatmul.f32.gmra.mxu0 %v434
        %v1030 = vpop.f32.mrf.mxu0
        %v1031 = vadd.f32 %v990, %v1030
        %1032 = vmatmul.f32.gmra.mxu0 %v436
        %v1033 = vpop.f32.mrf.mxu0
        %v1034 = vadd.f32 %v993, %v1033
        %1035 = vmatmul.f32.gmra.mxu0 %v438
        %v1036 = vpop.f32.mrf.mxu0
        %v1037 = vadd.f32 %v996, %v1036
        %1038 = vmatmul.f32.gmra.mxu0 %v440
        %v1039 = vpop.f32.mrf.mxu0
        %v1040 = vadd.f32 %v999, %v1039
        %1041 = vdwg.mxu0
        %1042 = vmatpush.msra.mxu0 %v927
        %1043 = vmatpush.msra.mxu0 %v925
        %1044 = vmatpush.msra.mxu0 %v923
        %1045 = vmatpush.msra.mxu0 %v921
        %1046 = vmatpush.msra.mxu0 %v919
        %1047 = vmatpush.msra.mxu0 %v917
        %1048 = vmatpush.msra.mxu0 %v915
        %1049 = vmatpush.msra.mxu0 %v913
        %1050 = vmatpush.msra.mxu0 %v911
        %1051 = vmatpush.msra.mxu0 %v909
        %1052 = vmatpush.msra.mxu0 %v907
        %1053 = vmatpush.msra.mxu0 %v905
        %1054 = vmatpush.msra.mxu0 %v903
        %1055 = vmatpush.msra.mxu0 %v901
        %1056 = vmatpush.msra.mxu0 %v899
        %1057 = vmatpush.msra.mxu0 %v897
        %1058 = vmatmul.f32.gmra.mxu0 %v425
        %v1059 = vpop.f32.mrf.mxu0
        %v1060 = vadd.f32 0.0, %v1059
        %1061 = vmatmul.f32.gmra.mxu0 %v427
        %v1062 = vpop.f32.mrf.mxu0
        %v1063 = vadd.f32 0.0, %v1062
        %1064 = vmatmul.f32.gmra.mxu0 %v429
        %v1065 = vpop.f32.mrf.mxu0
        %v1066 = vadd.f32 0.0, %v1065
        %1067 = vmatmul.f32.gmra.mxu0 %v431
        %v1068 = vpop.f32.mrf.mxu0
        %v1069 = vadd.f32 0.0, %v1068
        %1070 = vmatmul.f32.gmra.mxu0 %v433
        %v1071 = vpop.f32.mrf.mxu0
        %v1072 = vadd.f32 0.0, %v1071
        %1073 = vmatmul.f32.gmra.mxu0 %v435
        %v1074 = vpop.f32.mrf.mxu0
        %v1075 = vadd.f32 0.0, %v1074
        %1076 = vmatmul.f32.gmra.mxu0 %v437
        %v1077 = vpop.f32.mrf.mxu0
        %v1078 = vadd.f32 0.0, %v1077
        %1079 = vmatmul.f32.gmra.mxu0 %v439
        %v1080 = vpop.f32.mrf.mxu0
        %v1081 = vadd.f32 0.0, %v1080
        %1082 = vdwg.mxu0
        %1083 = vmatpush.msra.mxu0 %v959
        %1084 = vmatpush.msra.mxu0 %v957
        %1085 = vmatpush.msra.mxu0 %v955
        %1086 = vmatpush.msra.mxu0 %v953
        %1087 = vmatpush.msra.mxu0 %v951
        %1088 = vmatpush.msra.mxu0 %v949
        %1089 = vmatpush.msra.mxu0 %v947
        %1090 = vmatpush.msra.mxu0 %v945
        %1091 = vmatpush.msra.mxu0 %v943
        %1092 = vmatpush.msra.mxu0 %v941
        %1093 = vmatpush.msra.mxu0 %v939
        %1094 = vmatpush.msra.mxu0 %v937
        %1095 = vmatpush.msra.mxu0 %v935
        %1096 = vmatpush.msra.mxu0 %v933
        %1097 = vmatpush.msra.mxu0 %v931
        %1098 = vmatpush.msra.mxu0 %v929
        %1099 = vmatmul.f32.gmra.mxu0 %v426
        %v1100 = vpop.f32.mrf.mxu0
        %v1101 = vadd.f32 %v1060, %v1100
        %1102 = vmatmul.f32.gmra.mxu0 %v428
        %v1103 = vpop.f32.mrf.mxu0
        %v1104 = vadd.f32 %v1063, %v1103
        %1105 = vmatmul.f32.gmra.mxu0 %v430
        %v1106 = vpop.f32.mrf.mxu0
        %v1107 = vadd.f32 %v1066, %v1106
        %1108 = vmatmul.f32.gmra.mxu0 %v432
        %v1109 = vpop.f32.mrf.mxu0
        %v1110 = vadd.f32 %v1069, %v1109
        %1111 = vmatmul.f32.gmra.mxu0 %v434
        %v1112 = vpop.f32.mrf.mxu0
        %v1113 = vadd.f32 %v1072, %v1112
        %1114 = vmatmul.f32.gmra.mxu0 %v436
        %v1115 = vpop.f32.mrf.mxu0
        %v1116 = vadd.f32 %v1075, %v1115
        %1117 = vmatmul.f32.gmra.mxu0 %v438
        %v1118 = vpop.f32.mrf.mxu0
        %v1119 = vadd.f32 %v1078, %v1118
        %1120 = vmatmul.f32.gmra.mxu0 %v440
        %v1121 = vpop.f32.mrf.mxu0
        %v1122 = vadd.f32 %v1081, %v1121
        %1123 = vdwg.mxu0
        %s1124 = scalar_lea.vmem %s4, 128
        %v1125 = vld [vmem:[%s1124] sm:$0xff]
        %v1126 = vld [vmem:[%s1124 + $0x8] sm:$0xff]
        %v1127 = vld [vmem:[%s1124 + $0x10] sm:$0xff]
        %v1128 = vld [vmem:[%s1124 + $0x18] sm:$0xff]
        %v1129 = vld [vmem:[%s1124 + $0x20] sm:$0xff]
        %v1130 = vld [vmem:[%s1124 + $0x28] sm:$0xff]
        %v1131 = vld [vmem:[%s1124 + $0x30] sm:$0xff]
        %v1132 = vld [vmem:[%s1124 + $0x38] sm:$0xff]
        %v1133 = vld [vmem:[%s1124 + $0x40] sm:$0xff]
        %v1134 = vld [vmem:[%s1124 + $0x48] sm:$0xff]
        %v1135 = vld [vmem:[%s1124 + $0x50] sm:$0xff]
        %v1136 = vld [vmem:[%s1124 + $0x58] sm:$0xff]
        %v1137 = vld [vmem:[%s1124 + $0x60] sm:$0xff]
        %v1138 = vld [vmem:[%s1124 + $0x68] sm:$0xff]
        %v1139 = vld [vmem:[%s1124 + $0x70] sm:$0xff]
        %v1140 = vld [vmem:[%s1124 + $0x78] sm:$0xff]
        %v1142 = vsel %vm685, %v1125, 0
        %v1145 = vsel %vm685, %v1126, 0
        %v1148 = vsel %vm685, %v1127, 0
        %v1151 = vsel %vm685, %v1128, 0
        %v1154 = vsel %vm685, %v1129, 0
        %v1157 = vsel %vm685, %v1130, 0
        %v1160 = vsel %vm685, %v1131, 0
        %v1163 = vsel %vm685, %v1132, 0
        %v1166 = vsel %vm685, %v1133, 0
        %v1169 = vsel %vm685, %v1134, 0
        %v1172 = vsel %vm685, %v1135, 0
        %v1175 = vsel %vm685, %v1136, 0
        %v1178 = vsel %vm685, %v1137, 0
        %v1181 = vsel %vm685, %v1138, 0
        %v1184 = vsel %vm685, %v1139, 0
        %v1187 = vsel %vm685, %v1140, 0
        %1189 = vmatpush.msra.mxu0 0.0
        %1190 = vmatpush.msra.mxu0 0.0
        %1191 = vmatpush.msra.mxu0 0.0
        %1192 = vmatpush.msra.mxu0 0.0
        %1193 = vmatpush.msra.mxu0 0.0
        %1194 = vmatpush.msra.mxu0 0.0
        %1195 = vmatpush.msra.mxu0 0.0
        %1196 = vmatpush.msra.mxu0 0.0
        %1197 = vmatpush.msra.mxu0 %v1040
        %1198 = vmatpush.msra.mxu0 %v1037
        %1199 = vmatpush.msra.mxu0 %v1034
        %1200 = vmatpush.msra.mxu0 %v1031
        %1201 = vmatpush.msra.mxu0 %v1028
        %1202 = vmatpush.msra.mxu0 %v1025
        %1203 = vmatpush.msra.mxu0 %v1022
        %1204 = vmatpush.msra.mxu0 %v1019
        %1205 = vmatmul.f32.gmra.mxu0 %v1142
        %v1206 = vpop.f32.mrf.mxu0
        %v1207 = vadd.f32 0.0, %v1206
        %1208 = vmatmul.f32.gmra.mxu0 %v1145
        %v1209 = vpop.f32.mrf.mxu0
        %v1210 = vadd.f32 0.0, %v1209
        %1211 = vmatmul.f32.gmra.mxu0 %v1148
        %v1212 = vpop.f32.mrf.mxu0
        %v1213 = vadd.f32 0.0, %v1212
        %1214 = vmatmul.f32.gmra.mxu0 %v1151
        %v1215 = vpop.f32.mrf.mxu0
        %v1216 = vadd.f32 0.0, %v1215
        %1217 = vmatmul.f32.gmra.mxu0 %v1154
        %v1218 = vpop.f32.mrf.mxu0
        %v1219 = vadd.f32 0.0, %v1218
        %1220 = vmatmul.f32.gmra.mxu0 %v1157
        %v1221 = vpop.f32.mrf.mxu0
        %v1222 = vadd.f32 0.0, %v1221
        %1223 = vmatmul.f32.gmra.mxu0 %v1160
        %v1224 = vpop.f32.mrf.mxu0
        %v1225 = vadd.f32 0.0, %v1224
        %1226 = vmatmul.f32.gmra.mxu0 %v1163
        %v1227 = vpop.f32.mrf.mxu0
        %v1228 = vadd.f32 0.0, %v1227
        %1229 = vmatmul.f32.gmra.mxu0 %v1166
        %v1230 = vpop.f32.mrf.mxu0
        %v1231 = vadd.f32 0.0, %v1230
        %1232 = vmatmul.f32.gmra.mxu0 %v1169
        %v1233 = vpop.f32.mrf.mxu0
        %v1234 = vadd.f32 0.0, %v1233
        %1235 = vmatmul.f32.gmra.mxu0 %v1172
        %v1236 = vpop.f32.mrf.mxu0
        %v1237 = vadd.f32 0.0, %v1236
        %1238 = vmatmul.f32.gmra.mxu0 %v1175
        %v1239 = vpop.f32.mrf.mxu0
        %v1240 = vadd.f32 0.0, %v1239
        %1241 = vmatmul.f32.gmra.mxu0 %v1178
        %v1242 = vpop.f32.mrf.mxu0
        %v1243 = vadd.f32 0.0, %v1242
        %1244 = vmatmul.f32.gmra.mxu0 %v1181
        %v1245 = vpop.f32.mrf.mxu0
        %v1246 = vadd.f32 0.0, %v1245
        %1247 = vmatmul.f32.gmra.mxu0 %v1184
        %v1248 = vpop.f32.mrf.mxu0
        %v1249 = vadd.f32 0.0, %v1248
        %1250 = vmatmul.f32.gmra.mxu0 %v1187
        %v1251 = vpop.f32.mrf.mxu0
        %v1252 = vadd.f32 0.0, %v1251
        %1253 = vdwg.mxu0
        %1254 = vmatpush.msra.mxu0 0.0
        %1255 = vmatpush.msra.mxu0 0.0
        %1256 = vmatpush.msra.mxu0 0.0
        %1257 = vmatpush.msra.mxu0 0.0
        %1258 = vmatpush.msra.mxu0 0.0
        %1259 = vmatpush.msra.mxu0 0.0
        %1260 = vmatpush.msra.mxu0 0.0
        %1261 = vmatpush.msra.mxu0 0.0
        %1262 = vmatpush.msra.mxu0 %v1122
        %1263 = vmatpush.msra.mxu0 %v1119
        %1264 = vmatpush.msra.mxu0 %v1116
        %1265 = vmatpush.msra.mxu0 %v1113
        %1266 = vmatpush.msra.mxu0 %v1110
        %1267 = vmatpush.msra.mxu0 %v1107
        %1268 = vmatpush.msra.mxu0 %v1104
        %1269 = vmatpush.msra.mxu0 %v1101
        %1270 = vmatmul.f32.gmra.mxu0 %v1142
        %v1271 = vpop.f32.mrf.mxu0
        %v1272 = vadd.f32 0.0, %v1271
        %1273 = vmatmul.f32.gmra.mxu0 %v1145
        %v1274 = vpop.f32.mrf.mxu0
        %v1275 = vadd.f32 0.0, %v1274
        %1276 = vmatmul.f32.gmra.mxu0 %v1148
        %v1277 = vpop.f32.mrf.mxu0
        %v1278 = vadd.f32 0.0, %v1277
        %1279 = vmatmul.f32.gmra.mxu0 %v1151
        %v1280 = vpop.f32.mrf.mxu0
        %v1281 = vadd.f32 0.0, %v1280
        %1282 = vmatmul.f32.gmra.mxu0 %v1154
        %v1283 = vpop.f32.mrf.mxu0
        %v1284 = vadd.f32 0.0, %v1283
        %1285 = vmatmul.f32.gmra.mxu0 %v1157
        %v1286 = vpop.f32.mrf.mxu0
        %v1287 = vadd.f32 0.0, %v1286
        %1288 = vmatmul.f32.gmra.mxu0 %v1160
        %v1289 = vpop.f32.mrf.mxu0
        %v1290 = vadd.f32 0.0, %v1289
        %1291 = vmatmul.f32.gmra.mxu0 %v1163
        %v1292 = vpop.f32.mrf.mxu0
        %v1293 = vadd.f32 0.0, %v1292
        %1294 = vmatmul.f32.gmra.mxu0 %v1166
        %v1295 = vpop.f32.mrf.mxu0
        %v1296 = vadd.f32 0.0, %v1295
        %1297 = vmatmul.f32.gmra.mxu0 %v1169
        %v1298 = vpop.f32.mrf.mxu0
        %v1299 = vadd.f32 0.0, %v1298
        %1300 = vmatmul.f32.gmra.mxu0 %v1172
        %v1301 = vpop.f32.mrf.mxu0
        %v1302 = vadd.f32 0.0, %v1301
        %1303 = vmatmul.f32.gmra.mxu0 %v1175
        %v1304 = vpop.f32.mrf.mxu0
        %v1305 = vadd.f32 0.0, %v1304
        %1306 = vmatmul.f32.gmra.mxu0 %v1178
        %v1307 = vpop.f32.mrf.mxu0
        %v1308 = vadd.f32 0.0, %v1307
        %1309 = vmatmul.f32.gmra.mxu0 %v1181
        %v1310 = vpop.f32.mrf.mxu0
        %v1311 = vadd.f32 0.0, %v1310
        %1312 = vmatmul.f32.gmra.mxu0 %v1184
        %v1313 = vpop.f32.mrf.mxu0
        %v1314 = vadd.f32 0.0, %v1313
        %1315 = vmatmul.f32.gmra.mxu0 %v1187
        %v1316 = vpop.f32.mrf.mxu0
        %v1317 = vadd.f32 0.0, %v1316
        %1318 = vdwg.mxu0
        %v1319 = vld [vmem:[#allocation2] sm:$0xff]
        %v1320 = vld [vmem:[#allocation2 + $0x8] sm:$0xff]
        %v1321 = vld [vmem:[#allocation2 + $0x10] sm:$0xff]
        %v1322 = vld [vmem:[#allocation2 + $0x18] sm:$0xff]
        %v1323 = vld [vmem:[#allocation2 + $0x20] sm:$0xff]
        %v1324 = vld [vmem:[#allocation2 + $0x28] sm:$0xff]
        %v1325 = vld [vmem:[#allocation2 + $0x30] sm:$0xff]
        %v1326 = vld [vmem:[#allocation2 + $0x38] sm:$0xff]
        %v1327 = vld [vmem:[#allocation2 + $0x40] sm:$0xff]
        %v1328 = vld [vmem:[#allocation2 + $0x48] sm:$0xff]
        %v1329 = vld [vmem:[#allocation2 + $0x50] sm:$0xff]
        %v1330 = vld [vmem:[#allocation2 + $0x58] sm:$0xff]
        %v1331 = vld [vmem:[#allocation2 + $0x60] sm:$0xff]
        %v1332 = vld [vmem:[#allocation2 + $0x68] sm:$0xff]
        %v1333 = vld [vmem:[#allocation2 + $0x70] sm:$0xff]
        %v1334 = vld [vmem:[#allocation2 + $0x78] sm:$0xff]
        %v1335 = vld [vmem:[#allocation2 + $0x80] sm:$0xff]
        %v1336 = vld [vmem:[#allocation2 + $0x88] sm:$0xff]
        %v1337 = vld [vmem:[#allocation2 + $0x90] sm:$0xff]
        %v1338 = vld [vmem:[#allocation2 + $0x98] sm:$0xff]
        %v1339 = vld [vmem:[#allocation2 + $0xa0] sm:$0xff]
        %v1340 = vld [vmem:[#allocation2 + $0xa8] sm:$0xff]
        %v1341 = vld [vmem:[#allocation2 + $0xb0] sm:$0xff]
        %v1342 = vld [vmem:[#allocation2 + $0xb8] sm:$0xff]
        %v1343 = vld [vmem:[#allocation2 + $0xc0] sm:$0xff]
        %v1344 = vld [vmem:[#allocation2 + $0xc8] sm:$0xff]
        %v1345 = vld [vmem:[#allocation2 + $0xd0] sm:$0xff]
        %v1346 = vld [vmem:[#allocation2 + $0xd8] sm:$0xff]
        %v1347 = vld [vmem:[#allocation2 + $0xe0] sm:$0xff]
        %v1348 = vld [vmem:[#allocation2 + $0xe8] sm:$0xff]
        %v1349 = vld [vmem:[#allocation2 + $0xf0] sm:$0xff]
        %v1350 = vld [vmem:[#allocation2 + $0xf8] sm:$0xff]
        %v1351 = vadd.f32 %v1319, %v1207
        %v1352 = vadd.f32 %v1320, %v1272
        %v1353 = vadd.f32 %v1321, %v1210
        %v1354 = vadd.f32 %v1322, %v1275
        %v1355 = vadd.f32 %v1323, %v1213
        %v1356 = vadd.f32 %v1324, %v1278
        %v1357 = vadd.f32 %v1325, %v1216
        %v1358 = vadd.f32 %v1326, %v1281
        %v1359 = vadd.f32 %v1327, %v1219
        %v1360 = vadd.f32 %v1328, %v1284
        %v1361 = vadd.f32 %v1329, %v1222
        %v1362 = vadd.f32 %v1330, %v1287
        %v1363 = vadd.f32 %v1331, %v1225
        %v1364 = vadd.f32 %v1332, %v1290
        %v1365 = vadd.f32 %v1333, %v1228
        %v1366 = vadd.f32 %v1334, %v1293
        %v1367 = vadd.f32 %v1335, %v1231
        %v1368 = vadd.f32 %v1336, %v1296
        %v1369 = vadd.f32 %v1337, %v1234
        %v1370 = vadd.f32 %v1338, %v1299
        %v1371 = vadd.f32 %v1339, %v1237
        %v1372 = vadd.f32 %v1340, %v1302
        %v1373 = vadd.f32 %v1341, %v1240
        %v1374 = vadd.f32 %v1342, %v1305
        %v1375 = vadd.f32 %v1343, %v1243
        %v1376 = vadd.f32 %v1344, %v1308
        %v1377 = vadd.f32 %v1345, %v1246
        %v1378 = vadd.f32 %v1346, %v1311
        %v1379 = vadd.f32 %v1347, %v1249
        %v1380 = vadd.f32 %v1348, %v1314
        %v1381 = vadd.f32 %v1349, %v1252
        %v1382 = vadd.f32 %v1350, %v1317
        %1383 = vst [vmem:[#allocation2] sm:$0xff] %v1351
        %1384 = vst [vmem:[#allocation2 + $0x8] sm:$0xff] %v1352
        %1385 = vst [vmem:[#allocation2 + $0x10] sm:$0xff] %v1353
        %1386 = vst [vmem:[#allocation2 + $0x18] sm:$0xff] %v1354
        %1387 = vst [vmem:[#allocation2 + $0x20] sm:$0xff] %v1355
        %1388 = vst [vmem:[#allocation2 + $0x28] sm:$0xff] %v1356
        %1389 = vst [vmem:[#allocation2 + $0x30] sm:$0xff] %v1357
        %1390 = vst [vmem:[#allocation2 + $0x38] sm:$0xff] %v1358
        %1391 = vst [vmem:[#allocation2 + $0x40] sm:$0xff] %v1359
        %1392 = vst [vmem:[#allocation2 + $0x48] sm:$0xff] %v1360
        %1393 = vst [vmem:[#allocation2 + $0x50] sm:$0xff] %v1361
        %1394 = vst [vmem:[#allocation2 + $0x58] sm:$0xff] %v1362
        %1395 = vst [vmem:[#allocation2 + $0x60] sm:$0xff] %v1363
        %1396 = vst [vmem:[#allocation2 + $0x68] sm:$0xff] %v1364
        %1397 = vst [vmem:[#allocation2 + $0x70] sm:$0xff] %v1365
        %1398 = vst [vmem:[#allocation2 + $0x78] sm:$0xff] %v1366
        %1399 = vst [vmem:[#allocation2 + $0x80] sm:$0xff] %v1367
        %1400 = vst [vmem:[#allocation2 + $0x88] sm:$0xff] %v1368
        %1401 = vst [vmem:[#allocation2 + $0x90] sm:$0xff] %v1369
        %1402 = vst [vmem:[#allocation2 + $0x98] sm:$0xff] %v1370
        %1403 = vst [vmem:[#allocation2 + $0xa0] sm:$0xff] %v1371
        %1404 = vst [vmem:[#allocation2 + $0xa8] sm:$0xff] %v1372
        %1405 = vst [vmem:[#allocation2 + $0xb0] sm:$0xff] %v1373
        %1406 = vst [vmem:[#allocation2 + $0xb8] sm:$0xff] %v1374
        %1407 = vst [vmem:[#allocation2 + $0xc0] sm:$0xff] %v1375
        %1408 = vst [vmem:[#allocation2 + $0xc8] sm:$0xff] %v1376
        %1409 = vst [vmem:[#allocation2 + $0xd0] sm:$0xff] %v1377
        %1410 = vst [vmem:[#allocation2 + $0xd8] sm:$0xff] %v1378
        %1411 = vst [vmem:[#allocation2 + $0xe0] sm:$0xff] %v1379
        %1412 = vst [vmem:[#allocation2 + $0xe8] sm:$0xff] %v1380
        %1413 = vst [vmem:[#allocation2 + $0xf0] sm:$0xff] %v1381
        %1414 = vst [vmem:[#allocation2 + $0xf8] sm:$0xff] %v1382
        %v1415 = vld [vmem:[#allocation8] sm:$0xff]
        %v1416 = vld [vmem:[#allocation8 + $0x8] sm:$0xff]
        %v1417 = vld [vmem:[#allocation8 + $0x10] sm:$0xff]
        %v1418 = vld [vmem:[#allocation8 + $0x18] sm:$0xff]
        %v1419 = vld [vmem:[#allocation8 + $0x20] sm:$0xff]
        %v1420 = vld [vmem:[#allocation8 + $0x28] sm:$0xff]
        %v1421 = vld [vmem:[#allocation8 + $0x30] sm:$0xff]
        %v1422 = vld [vmem:[#allocation8 + $0x38] sm:$0xff]
        %v1423 = vld [vmem:[#allocation8 + $0x40] sm:$0xff]
        %v1424 = vld [vmem:[#allocation8 + $0x48] sm:$0xff]
        %v1425 = vld [vmem:[#allocation8 + $0x50] sm:$0xff]
        %v1426 = vld [vmem:[#allocation8 + $0x58] sm:$0xff]
        %v1427 = vld [vmem:[#allocation8 + $0x60] sm:$0xff]
        %v1428 = vld [vmem:[#allocation8 + $0x68] sm:$0xff]
        %v1429 = vld [vmem:[#allocation8 + $0x70] sm:$0xff]
        %v1430 = vld [vmem:[#allocation8 + $0x78] sm:$0xff]
        %v1431 = vld [vmem:[#allocation8 + $0x80] sm:$0xff]
        %v1432 = vld [vmem:[#allocation8 + $0x88] sm:$0xff]
        %v1433 = vld [vmem:[#allocation8 + $0x90] sm:$0xff]
        %v1434 = vld [vmem:[#allocation8 + $0x98] sm:$0xff]
        %v1435 = vld [vmem:[#allocation8 + $0xa0] sm:$0xff]
        %v1436 = vld [vmem:[#allocation8 + $0xa8] sm:$0xff]
        %v1437 = vld [vmem:[#allocation8 + $0xb0] sm:$0xff]
        %v1438 = vld [vmem:[#allocation8 + $0xb8] sm:$0xff]
        %v1439 = vld [vmem:[#allocation8 + $0xc0] sm:$0xff]
        %v1440 = vld [vmem:[#allocation8 + $0xc8] sm:$0xff]
        %v1441 = vld [vmem:[#allocation8 + $0xd0] sm:$0xff]
        %v1442 = vld [vmem:[#allocation8 + $0xd8] sm:$0xff]
        %v1443 = vld [vmem:[#allocation8 + $0xe0] sm:$0xff]
        %v1444 = vld [vmem:[#allocation8 + $0xe8] sm:$0xff]
        %v1445 = vld [vmem:[#allocation8 + $0xf0] sm:$0xff]
        %v1446 = vld [vmem:[#allocation8 + $0xf8] sm:$0xff]
        %v1447 = vld [vmem:[#allocation8 + $0x100] sm:$0xff]
        %v1448 = vld [vmem:[#allocation8 + $0x108] sm:$0xff]
        %v1449 = vld [vmem:[#allocation8 + $0x110] sm:$0xff]
        %v1450 = vld [vmem:[#allocation8 + $0x118] sm:$0xff]
        %v1451 = vld [vmem:[#allocation8 + $0x120] sm:$0xff]
        %v1452 = vld [vmem:[#allocation8 + $0x128] sm:$0xff]
        %v1453 = vld [vmem:[#allocation8 + $0x130] sm:$0xff]
        %v1454 = vld [vmem:[#allocation8 + $0x138] sm:$0xff]
        %v1455 = vld [vmem:[#allocation8 + $0x140] sm:$0xff]
        %v1456 = vld [vmem:[#allocation8 + $0x148] sm:$0xff]
        %v1457 = vld [vmem:[#allocation8 + $0x150] sm:$0xff]
        %v1458 = vld [vmem:[#allocation8 + $0x158] sm:$0xff]
        %v1459 = vld [vmem:[#allocation8 + $0x160] sm:$0xff]
        %v1460 = vld [vmem:[#allocation8 + $0x168] sm:$0xff]
        %v1461 = vld [vmem:[#allocation8 + $0x170] sm:$0xff]
        %v1462 = vld [vmem:[#allocation8 + $0x178] sm:$0xff]
        %v1463 = vld [vmem:[#allocation8 + $0x180] sm:$0xff]
        %v1464 = vld [vmem:[#allocation8 + $0x188] sm:$0xff]
        %v1465 = vld [vmem:[#allocation8 + $0x190] sm:$0xff]
        %v1466 = vld [vmem:[#allocation8 + $0x198] sm:$0xff]
        %v1467 = vld [vmem:[#allocation8 + $0x1a0] sm:$0xff]
        %v1468 = vld [vmem:[#allocation8 + $0x1a8] sm:$0xff]
        %v1469 = vld [vmem:[#allocation8 + $0x1b0] sm:$0xff]
        %v1470 = vld [vmem:[#allocation8 + $0x1b8] sm:$0xff]
        %v1471 = vld [vmem:[#allocation8 + $0x1c0] sm:$0xff]
        %v1472 = vld [vmem:[#allocation8 + $0x1c8] sm:$0xff]
        %v1473 = vld [vmem:[#allocation8 + $0x1d0] sm:$0xff]
        %v1474 = vld [vmem:[#allocation8 + $0x1d8] sm:$0xff]
        %v1475 = vld [vmem:[#allocation8 + $0x1e0] sm:$0xff]
        %v1476 = vld [vmem:[#allocation8 + $0x1e8] sm:$0xff]
        %v1477 = vld [vmem:[#allocation8 + $0x1f0] sm:$0xff]
        %v1478 = vld [vmem:[#allocation8 + $0x1f8] sm:$0xff]
        %1479 = vmatpush.msra.mxu0 %v1445
        %1480 = vmatpush.msra.mxu0 %v1443
        %1481 = vmatpush.msra.mxu0 %v1441
        %1482 = vmatpush.msra.mxu0 %v1439
        %1483 = vmatpush.msra.mxu0 %v1437
        %1484 = vmatpush.msra.mxu0 %v1435
        %1485 = vmatpush.msra.mxu0 %v1433
        %1486 = vmatpush.msra.mxu0 %v1431
        %1487 = vmatpush.msra.mxu0 %v1429
        %1488 = vmatpush.msra.mxu0 %v1427
        %1489 = vmatpush.msra.mxu0 %v1425
        %1490 = vmatpush.msra.mxu0 %v1423
        %1491 = vmatpush.msra.mxu0 %v1421
        %1492 = vmatpush.msra.mxu0 %v1419
        %1493 = vmatpush.msra.mxu0 %v1417
        %1494 = vmatpush.msra.mxu0 %v1415
        %1495 = vmatmul.f32.gmra.mxu0 %v425
        %v1496 = vpop.f32.mrf.mxu0
        %v1497 = vadd.f32 0.0, %v1496
        %1498 = vmatmul.f32.gmra.mxu0 %v427
        %v1499 = vpop.f32.mrf.mxu0
        %v1500 = vadd.f32 0.0, %v1499
        %1501 = vmatmul.f32.gmra.mxu0 %v429
        %v1502 = vpop.f32.mrf.mxu0
        %v1503 = vadd.f32 0.0, %v1502
        %1504 = vmatmul.f32.gmra.mxu0 %v431
        %v1505 = vpop.f32.mrf.mxu0
        %v1506 = vadd.f32 0.0, %v1505
        %1507 = vmatmul.f32.gmra.mxu0 %v433
        %v1508 = vpop.f32.mrf.mxu0
        %v1509 = vadd.f32 0.0, %v1508
        %1510 = vmatmul.f32.gmra.mxu0 %v435
        %v1511 = vpop.f32.mrf.mxu0
        %v1512 = vadd.f32 0.0, %v1511
        %1513 = vmatmul.f32.gmra.mxu0 %v437
        %v1514 = vpop.f32.mrf.mxu0
        %v1515 = vadd.f32 0.0, %v1514
        %1516 = vmatmul.f32.gmra.mxu0 %v439
        %v1517 = vpop.f32.mrf.mxu0
        %v1518 = vadd.f32 0.0, %v1517
        %1519 = vdwg.mxu0
        %1520 = vmatpush.msra.mxu0 %v1477
        %1521 = vmatpush.msra.mxu0 %v1475
        %1522 = vmatpush.msra.mxu0 %v1473
        %1523 = vmatpush.msra.mxu0 %v1471
        %1524 = vmatpush.msra.mxu0 %v1469
        %1525 = vmatpush.msra.mxu0 %v1467
        %1526 = vmatpush.msra.mxu0 %v1465
        %1527 = vmatpush.msra.mxu0 %v1463
        %1528 = vmatpush.msra.mxu0 %v1461
        %1529 = vmatpush.msra.mxu0 %v1459
        %1530 = vmatpush.msra.mxu0 %v1457
        %1531 = vmatpush.msra.mxu0 %v1455
        %1532 = vmatpush.msra.mxu0 %v1453
        %1533 = vmatpush.msra.mxu0 %v1451
        %1534 = vmatpush.msra.mxu0 %v1449
        %1535 = vmatpush.msra.mxu0 %v1447
        %1536 = vmatmul.f32.gmra.mxu0 %v426
        %v1537 = vpop.f32.mrf.mxu0
        %v1538 = vadd.f32 %v1497, %v1537
        %1539 = vmatmul.f32.gmra.mxu0 %v428
        %v1540 = vpop.f32.mrf.mxu0
        %v1541 = vadd.f32 %v1500, %v1540
        %1542 = vmatmul.f32.gmra.mxu0 %v430
        %v1543 = vpop.f32.mrf.mxu0
        %v1544 = vadd.f32 %v1503, %v1543
        %1545 = vmatmul.f32.gmra.mxu0 %v432
        %v1546 = vpop.f32.mrf.mxu0
        %v1547 = vadd.f32 %v1506, %v1546
        %1548 = vmatmul.f32.gmra.mxu0 %v434
        %v1549 = vpop.f32.mrf.mxu0
        %v1550 = vadd.f32 %v1509, %v1549
        %1551 = vmatmul.f32.gmra.mxu0 %v436
        %v1552 = vpop.f32.mrf.mxu0
        %v1553 = vadd.f32 %v1512, %v1552
        %1554 = vmatmul.f32.gmra.mxu0 %v438
        %v1555 = vpop.f32.mrf.mxu0
        %v1556 = vadd.f32 %v1515, %v1555
        %1557 = vmatmul.f32.gmra.mxu0 %v440
        %v1558 = vpop.f32.mrf.mxu0
        %v1559 = vadd.f32 %v1518, %v1558
        %1560 = vdwg.mxu0
        %1561 = vmatpush.msra.mxu0 %v1446
        %1562 = vmatpush.msra.mxu0 %v1444
        %1563 = vmatpush.msra.mxu0 %v1442
        %1564 = vmatpush.msra.mxu0 %v1440
        %1565 = vmatpush.msra.mxu0 %v1438
        %1566 = vmatpush.msra.mxu0 %v1436
        %1567 = vmatpush.msra.mxu0 %v1434
        %1568 = vmatpush.msra.mxu0 %v1432
        %1569 = vmatpush.msra.mxu0 %v1430
        %1570 = vmatpush.msra.mxu0 %v1428
        %1571 = vmatpush.msra.mxu0 %v1426
        %1572 = vmatpush.msra.mxu0 %v1424
        %1573 = vmatpush.msra.mxu0 %v1422
        %1574 = vmatpush.msra.mxu0 %v1420
        %1575 = vmatpush.msra.mxu0 %v1418
        %1576 = vmatpush.msra.mxu0 %v1416
        %1577 = vmatmul.f32.gmra.mxu0 %v425
        %v1578 = vpop.f32.mrf.mxu0
        %v1579 = vadd.f32 0.0, %v1578
        %1580 = vmatmul.f32.gmra.mxu0 %v427
        %v1581 = vpop.f32.mrf.mxu0
        %v1582 = vadd.f32 0.0, %v1581
        %1583 = vmatmul.f32.gmra.mxu0 %v429
        %v1584 = vpop.f32.mrf.mxu0
        %v1585 = vadd.f32 0.0, %v1584
        %1586 = vmatmul.f32.gmra.mxu0 %v431
        %v1587 = vpop.f32.mrf.mxu0
        %v1588 = vadd.f32 0.0, %v1587
        %1589 = vmatmul.f32.gmra.mxu0 %v433
        %v1590 = vpop.f32.mrf.mxu0
        %v1591 = vadd.f32 0.0, %v1590
        %1592 = vmatmul.f32.gmra.mxu0 %v435
        %v1593 = vpop.f32.mrf.mxu0
        %v1594 = vadd.f32 0.0, %v1593
        %1595 = vmatmul.f32.gmra.mxu0 %v437
        %v1596 = vpop.f32.mrf.mxu0
        %v1597 = vadd.f32 0.0, %v1596
        %1598 = vmatmul.f32.gmra.mxu0 %v439
        %v1599 = vpop.f32.mrf.mxu0
        %v1600 = vadd.f32 0.0, %v1599
        %1601 = vdwg.mxu0
        %1602 = vmatpush.msra.mxu0 %v1478
        %1603 = vmatpush.msra.mxu0 %v1476
        %1604 = vmatpush.msra.mxu0 %v1474
        %1605 = vmatpush.msra.mxu0 %v1472
        %1606 = vmatpush.msra.mxu0 %v1470
        %1607 = vmatpush.msra.mxu0 %v1468
        %1608 = vmatpush.msra.mxu0 %v1466
        %1609 = vmatpush.msra.mxu0 %v1464
        %1610 = vmatpush.msra.mxu0 %v1462
        %1611 = vmatpush.msra.mxu0 %v1460
        %1612 = vmatpush.msra.mxu0 %v1458
        %1613 = vmatpush.msra.mxu0 %v1456
        %1614 = vmatpush.msra.mxu0 %v1454
        %1615 = vmatpush.msra.mxu0 %v1452
        %1616 = vmatpush.msra.mxu0 %v1450
        %1617 = vmatpush.msra.mxu0 %v1448
        %1618 = vmatmul.f32.gmra.mxu0 %v426
        %v1619 = vpop.f32.mrf.mxu0
        %v1620 = vadd.f32 %v1579, %v1619
        %1621 = vmatmul.f32.gmra.mxu0 %v428
        %v1622 = vpop.f32.mrf.mxu0
        %v1623 = vadd.f32 %v1582, %v1622
        %1624 = vmatmul.f32.gmra.mxu0 %v430
        %v1625 = vpop.f32.mrf.mxu0
        %v1626 = vadd.f32 %v1585, %v1625
        %1627 = vmatmul.f32.gmra.mxu0 %v432
        %v1628 = vpop.f32.mrf.mxu0
        %v1629 = vadd.f32 %v1588, %v1628
        %1630 = vmatmul.f32.gmra.mxu0 %v434
        %v1631 = vpop.f32.mrf.mxu0
        %v1632 = vadd.f32 %v1591, %v1631
        %1633 = vmatmul.f32.gmra.mxu0 %v436
        %v1634 = vpop.f32.mrf.mxu0
        %v1635 = vadd.f32 %v1594, %v1634
        %1636 = vmatmul.f32.gmra.mxu0 %v438
        %v1637 = vpop.f32.mrf.mxu0
        %v1638 = vadd.f32 %v1597, %v1637
        %1639 = vmatmul.f32.gmra.mxu0 %v440
        %v1640 = vpop.f32.mrf.mxu0
        %v1641 = vadd.f32 %v1600, %v1640
        %1642 = vdwg.mxu0
        %s1643 = scalar_lea.vmem %s4, 256
        %v1644 = vld [vmem:[%s1643] sm:$0xff]
        %v1645 = vld [vmem:[%s1643 + $0x8] sm:$0xff]
        %v1646 = vld [vmem:[%s1643 + $0x10] sm:$0xff]
        %v1647 = vld [vmem:[%s1643 + $0x18] sm:$0xff]
        %v1648 = vld [vmem:[%s1643 + $0x20] sm:$0xff]
        %v1649 = vld [vmem:[%s1643 + $0x28] sm:$0xff]
        %v1650 = vld [vmem:[%s1643 + $0x30] sm:$0xff]
        %v1651 = vld [vmem:[%s1643 + $0x38] sm:$0xff]
        %v1652 = vld [vmem:[%s1643 + $0x40] sm:$0xff]
        %v1653 = vld [vmem:[%s1643 + $0x48] sm:$0xff]
        %v1654 = vld [vmem:[%s1643 + $0x50] sm:$0xff]
        %v1655 = vld [vmem:[%s1643 + $0x58] sm:$0xff]
        %v1656 = vld [vmem:[%s1643 + $0x60] sm:$0xff]
        %v1657 = vld [vmem:[%s1643 + $0x68] sm:$0xff]
        %v1658 = vld [vmem:[%s1643 + $0x70] sm:$0xff]
        %v1659 = vld [vmem:[%s1643 + $0x78] sm:$0xff]
        %v1661 = vsel %vm685, %v1644, 0
        %v1664 = vsel %vm685, %v1645, 0
        %v1667 = vsel %vm685, %v1646, 0
        %v1670 = vsel %vm685, %v1647, 0
        %v1673 = vsel %vm685, %v1648, 0
        %v1676 = vsel %vm685, %v1649, 0
        %v1679 = vsel %vm685, %v1650, 0
        %v1682 = vsel %vm685, %v1651, 0
        %v1685 = vsel %vm685, %v1652, 0
        %v1688 = vsel %vm685, %v1653, 0
        %v1691 = vsel %vm685, %v1654, 0
        %v1694 = vsel %vm685, %v1655, 0
        %v1697 = vsel %vm685, %v1656, 0
        %v1700 = vsel %vm685, %v1657, 0
        %v1703 = vsel %vm685, %v1658, 0
        %v1706 = vsel %vm685, %v1659, 0
        %1708 = vmatpush.msra.mxu0 0.0
        %1709 = vmatpush.msra.mxu0 0.0
        %1710 = vmatpush.msra.mxu0 0.0
        %1711 = vmatpush.msra.mxu0 0.0
        %1712 = vmatpush.msra.mxu0 0.0
        %1713 = vmatpush.msra.mxu0 0.0
        %1714 = vmatpush.msra.mxu0 0.0
        %1715 = vmatpush.msra.mxu0 0.0
        %1716 = vmatpush.msra.mxu0 %v1559
        %1717 = vmatpush.msra.mxu0 %v1556
        %1718 = vmatpush.msra.mxu0 %v1553
        %1719 = vmatpush.msra.mxu0 %v1550
        %1720 = vmatpush.msra.mxu0 %v1547
        %1721 = vmatpush.msra.mxu0 %v1544
        %1722 = vmatpush.msra.mxu0 %v1541
        %1723 = vmatpush.msra.mxu0 %v1538
        %1724 = vmatmul.f32.gmra.mxu0 %v1661
        %v1725 = vpop.f32.mrf.mxu0
        %v1726 = vadd.f32 0.0, %v1725
        %1727 = vmatmul.f32.gmra.mxu0 %v1664
        %v1728 = vpop.f32.mrf.mxu0
        %v1729 = vadd.f32 0.0, %v1728
        %1730 = vmatmul.f32.gmra.mxu0 %v1667
        %v1731 = vpop.f32.mrf.mxu0
        %v1732 = vadd.f32 0.0, %v1731
        %1733 = vmatmul.f32.gmra.mxu0 %v1670
        %v1734 = vpop.f32.mrf.mxu0
        %v1735 = vadd.f32 0.0, %v1734
        %1736 = vmatmul.f32.gmra.mxu0 %v1673
        %v1737 = vpop.f32.mrf.mxu0
        %v1738 = vadd.f32 0.0, %v1737
        %1739 = vmatmul.f32.gmra.mxu0 %v1676
        %v1740 = vpop.f32.mrf.mxu0
        %v1741 = vadd.f32 0.0, %v1740
        %1742 = vmatmul.f32.gmra.mxu0 %v1679
        %v1743 = vpop.f32.mrf.mxu0
        %v1744 = vadd.f32 0.0, %v1743
        %1745 = vmatmul.f32.gmra.mxu0 %v1682
        %v1746 = vpop.f32.mrf.mxu0
        %v1747 = vadd.f32 0.0, %v1746
        %1748 = vmatmul.f32.gmra.mxu0 %v1685
        %v1749 = vpop.f32.mrf.mxu0
        %v1750 = vadd.f32 0.0, %v1749
        %1751 = vmatmul.f32.gmra.mxu0 %v1688
        %v1752 = vpop.f32.mrf.mxu0
        %v1753 = vadd.f32 0.0, %v1752
        %1754 = vmatmul.f32.gmra.mxu0 %v1691
        %v1755 = vpop.f32.mrf.mxu0
        %v1756 = vadd.f32 0.0, %v1755
        %1757 = vmatmul.f32.gmra.mxu0 %v1694
        %v1758 = vpop.f32.mrf.mxu0
        %v1759 = vadd.f32 0.0, %v1758
        %1760 = vmatmul.f32.gmra.mxu0 %v1697
        %v1761 = vpop.f32.mrf.mxu0
        %v1762 = vadd.f32 0.0, %v1761
        %1763 = vmatmul.f32.gmra.mxu0 %v1700
        %v1764 = vpop.f32.mrf.mxu0
        %v1765 = vadd.f32 0.0, %v1764
        %1766 = vmatmul.f32.gmra.mxu0 %v1703
        %v1767 = vpop.f32.mrf.mxu0
        %v1768 = vadd.f32 0.0, %v1767
        %1769 = vmatmul.f32.gmra.mxu0 %v1706
        %v1770 = vpop.f32.mrf.mxu0
        %v1771 = vadd.f32 0.0, %v1770
        %1772 = vdwg.mxu0
        %1773 = vmatpush.msra.mxu0 0.0
        %1774 = vmatpush.msra.mxu0 0.0
        %1775 = vmatpush.msra.mxu0 0.0
        %1776 = vmatpush.msra.mxu0 0.0
        %1777 = vmatpush.msra.mxu0 0.0
        %1778 = vmatpush.msra.mxu0 0.0
        %1779 = vmatpush.msra.mxu0 0.0
        %1780 = vmatpush.msra.mxu0 0.0
        %1781 = vmatpush.msra.mxu0 %v1641
        %1782 = vmatpush.msra.mxu0 %v1638
        %1783 = vmatpush.msra.mxu0 %v1635
        %1784 = vmatpush.msra.mxu0 %v1632
        %1785 = vmatpush.msra.mxu0 %v1629
        %1786 = vmatpush.msra.mxu0 %v1626
        %1787 = vmatpush.msra.mxu0 %v1623
        %1788 = vmatpush.msra.mxu0 %v1620
        %1789 = vmatmul.f32.gmra.mxu0 %v1661
        %v1790 = vpop.f32.mrf.mxu0
        %v1791 = vadd.f32 0.0, %v1790
        %1792 = vmatmul.f32.gmra.mxu0 %v1664
        %v1793 = vpop.f32.mrf.mxu0
        %v1794 = vadd.f32 0.0, %v1793
        %1795 = vmatmul.f32.gmra.mxu0 %v1667
        %v1796 = vpop.f32.mrf.mxu0
        %v1797 = vadd.f32 0.0, %v1796
        %1798 = vmatmul.f32.gmra.mxu0 %v1670
        %v1799 = vpop.f32.mrf.mxu0
        %v1800 = vadd.f32 0.0, %v1799
        %1801 = vmatmul.f32.gmra.mxu0 %v1673
        %v1802 = vpop.f32.mrf.mxu0
        %v1803 = vadd.f32 0.0, %v1802
        %1804 = vmatmul.f32.gmra.mxu0 %v1676
        %v1805 = vpop.f32.mrf.mxu0
        %v1806 = vadd.f32 0.0, %v1805
        %1807 = vmatmul.f32.gmra.mxu0 %v1679
        %v1808 = vpop.f32.mrf.mxu0
        %v1809 = vadd.f32 0.0, %v1808
        %1810 = vmatmul.f32.gmra.mxu0 %v1682
        %v1811 = vpop.f32.mrf.mxu0
        %v1812 = vadd.f32 0.0, %v1811
        %1813 = vmatmul.f32.gmra.mxu0 %v1685
        %v1814 = vpop.f32.mrf.mxu0
        %v1815 = vadd.f32 0.0, %v1814
        %1816 = vmatmul.f32.gmra.mxu0 %v1688
        %v1817 = vpop.f32.mrf.mxu0
        %v1818 = vadd.f32 0.0, %v1817
        %1819 = vmatmul.f32.gmra.mxu0 %v1691
        %v1820 = vpop.f32.mrf.mxu0
        %v1821 = vadd.f32 0.0, %v1820
        %1822 = vmatmul.f32.gmra.mxu0 %v1694
        %v1823 = vpop.f32.mrf.mxu0
        %v1824 = vadd.f32 0.0, %v1823
        %1825 = vmatmul.f32.gmra.mxu0 %v1697
        %v1826 = vpop.f32.mrf.mxu0
        %v1827 = vadd.f32 0.0, %v1826
        %1828 = vmatmul.f32.gmra.mxu0 %v1700
        %v1829 = vpop.f32.mrf.mxu0
        %v1830 = vadd.f32 0.0, %v1829
        %1831 = vmatmul.f32.gmra.mxu0 %v1703
        %v1832 = vpop.f32.mrf.mxu0
        %v1833 = vadd.f32 0.0, %v1832
        %1834 = vmatmul.f32.gmra.mxu0 %v1706
        %v1835 = vpop.f32.mrf.mxu0
        %v1836 = vadd.f32 0.0, %v1835
        %1837 = vdwg.mxu0
        %v1838 = vld [vmem:[#allocation2] sm:$0xff]
        %v1839 = vld [vmem:[#allocation2 + $0x8] sm:$0xff]
        %v1840 = vld [vmem:[#allocation2 + $0x10] sm:$0xff]
        %v1841 = vld [vmem:[#allocation2 + $0x18] sm:$0xff]
        %v1842 = vld [vmem:[#allocation2 + $0x20] sm:$0xff]
        %v1843 = vld [vmem:[#allocation2 + $0x28] sm:$0xff]
        %v1844 = vld [vmem:[#allocation2 + $0x30] sm:$0xff]
        %v1845 = vld [vmem:[#allocation2 + $0x38] sm:$0xff]
        %v1846 = vld [vmem:[#allocation2 + $0x40] sm:$0xff]
        %v1847 = vld [vmem:[#allocation2 + $0x48] sm:$0xff]
        %v1848 = vld [vmem:[#allocation2 + $0x50] sm:$0xff]
        %v1849 = vld [vmem:[#allocation2 + $0x58] sm:$0xff]
        %v1850 = vld [vmem:[#allocation2 + $0x60] sm:$0xff]
        %v1851 = vld [vmem:[#allocation2 + $0x68] sm:$0xff]
        %v1852 = vld [vmem:[#allocation2 + $0x70] sm:$0xff]
        %v1853 = vld [vmem:[#allocation2 + $0x78] sm:$0xff]
        %v1854 = vld [vmem:[#allocation2 + $0x80] sm:$0xff]
        %v1855 = vld [vmem:[#allocation2 + $0x88] sm:$0xff]
        %v1856 = vld [vmem:[#allocation2 + $0x90] sm:$0xff]
        %v1857 = vld [vmem:[#allocation2 + $0x98] sm:$0xff]
        %v1858 = vld [vmem:[#allocation2 + $0xa0] sm:$0xff]
        %v1859 = vld [vmem:[#allocation2 + $0xa8] sm:$0xff]
        %v1860 = vld [vmem:[#allocation2 + $0xb0] sm:$0xff]
        %v1861 = vld [vmem:[#allocation2 + $0xb8] sm:$0xff]
        %v1862 = vld [vmem:[#allocation2 + $0xc0] sm:$0xff]
        %v1863 = vld [vmem:[#allocation2 + $0xc8] sm:$0xff]
        %v1864 = vld [vmem:[#allocation2 + $0xd0] sm:$0xff]
        %v1865 = vld [vmem:[#allocation2 + $0xd8] sm:$0xff]
        %v1866 = vld [vmem:[#allocation2 + $0xe0] sm:$0xff]
        %v1867 = vld [vmem:[#allocation2 + $0xe8] sm:$0xff]
        %v1868 = vld [vmem:[#allocation2 + $0xf0] sm:$0xff]
        %v1869 = vld [vmem:[#allocation2 + $0xf8] sm:$0xff]
        %v1870 = vadd.f32 %v1838, %v1726
        %v1871 = vadd.f32 %v1839, %v1791
        %v1872 = vadd.f32 %v1840, %v1729
        %v1873 = vadd.f32 %v1841, %v1794
        %v1874 = vadd.f32 %v1842, %v1732
        %v1875 = vadd.f32 %v1843, %v1797
        %v1876 = vadd.f32 %v1844, %v1735
        %v1877 = vadd.f32 %v1845, %v1800
        %v1878 = vadd.f32 %v1846, %v1738
        %v1879 = vadd.f32 %v1847, %v1803
        %v1880 = vadd.f32 %v1848, %v1741
        %v1881 = vadd.f32 %v1849, %v1806
        %v1882 = vadd.f32 %v1850, %v1744
        %v1883 = vadd.f32 %v1851, %v1809
        %v1884 = vadd.f32 %v1852, %v1747
        %v1885 = vadd.f32 %v1853, %v1812
        %v1886 = vadd.f32 %v1854, %v1750
        %v1887 = vadd.f32 %v1855, %v1815
        %v1888 = vadd.f32 %v1856, %v1753
        %v1889 = vadd.f32 %v1857, %v1818
        %v1890 = vadd.f32 %v1858, %v1756
        %v1891 = vadd.f32 %v1859, %v1821
        %v1892 = vadd.f32 %v1860, %v1759
        %v1893 = vadd.f32 %v1861, %v1824
        %v1894 = vadd.f32 %v1862, %v1762
        %v1895 = vadd.f32 %v1863, %v1827
        %v1896 = vadd.f32 %v1864, %v1765
        %v1897 = vadd.f32 %v1865, %v1830
        %v1898 = vadd.f32 %v1866, %v1768
        %v1899 = vadd.f32 %v1867, %v1833
        %v1900 = vadd.f32 %v1868, %v1771
        %v1901 = vadd.f32 %v1869, %v1836
        %1902 = vst [vmem:[#allocation2] sm:$0xff] %v1870
        %1903 = vst [vmem:[#allocation2 + $0x8] sm:$0xff] %v1871
        %1904 = vst [vmem:[#allocation2 + $0x10] sm:$0xff] %v1872
        %1905 = vst [vmem:[#allocation2 + $0x18] sm:$0xff] %v1873
        %1906 = vst [vmem:[#allocation2 + $0x20] sm:$0xff] %v1874
        %1907 = vst [vmem:[#allocation2 + $0x28] sm:$0xff] %v1875
        %1908 = vst [vmem:[#allocation2 + $0x30] sm:$0xff] %v1876
        %1909 = vst [vmem:[#allocation2 + $0x38] sm:$0xff] %v1877
        %1910 = vst [vmem:[#allocation2 + $0x40] sm:$0xff] %v1878
        %1911 = vst [vmem:[#allocation2 + $0x48] sm:$0xff] %v1879
        %1912 = vst [vmem:[#allocation2 + $0x50] sm:$0xff] %v1880
        %1913 = vst [vmem:[#allocation2 + $0x58] sm:$0xff] %v1881
        %1914 = vst [vmem:[#allocation2 + $0x60] sm:$0xff] %v1882
        %1915 = vst [vmem:[#allocation2 + $0x68] sm:$0xff] %v1883
        %1916 = vst [vmem:[#allocation2 + $0x70] sm:$0xff] %v1884
        %1917 = vst [vmem:[#allocation2 + $0x78] sm:$0xff] %v1885
        %1918 = vst [vmem:[#allocation2 + $0x80] sm:$0xff] %v1886
        %1919 = vst [vmem:[#allocation2 + $0x88] sm:$0xff] %v1887
        %1920 = vst [vmem:[#allocation2 + $0x90] sm:$0xff] %v1888
        %1921 = vst [vmem:[#allocation2 + $0x98] sm:$0xff] %v1889
        %1922 = vst [vmem:[#allocation2 + $0xa0] sm:$0xff] %v1890
        %1923 = vst [vmem:[#allocation2 + $0xa8] sm:$0xff] %v1891
        %1924 = vst [vmem:[#allocation2 + $0xb0] sm:$0xff] %v1892
        %1925 = vst [vmem:[#allocation2 + $0xb8] sm:$0xff] %v1893
        %1926 = vst [vmem:[#allocation2 + $0xc0] sm:$0xff] %v1894
        %1927 = vst [vmem:[#allocation2 + $0xc8] sm:$0xff] %v1895
        %1928 = vst [vmem:[#allocation2 + $0xd0] sm:$0xff] %v1896
        %1929 = vst [vmem:[#allocation2 + $0xd8] sm:$0xff] %v1897
        %1930 = vst [vmem:[#allocation2 + $0xe0] sm:$0xff] %v1898
        %1931 = vst [vmem:[#allocation2 + $0xe8] sm:$0xff] %v1899
        %1932 = vst [vmem:[#allocation2 + $0xf0] sm:$0xff] %v1900
        %1933 = vst [vmem:[#allocation2 + $0xf8] sm:$0xff] %v1901
        %v1934 = vld [vmem:[#allocation2] sm:$0xff]
        %v1935 = vld [vmem:[#allocation2 + $0x8] sm:$0xff]
        %v1936 = vld [vmem:[#allocation2 + $0x10] sm:$0xff]
        %v1937 = vld [vmem:[#allocation2 + $0x18] sm:$0xff]
        %v1938 = vld [vmem:[#allocation2 + $0x20] sm:$0xff]
        %v1939 = vld [vmem:[#allocation2 + $0x28] sm:$0xff]
        %v1940 = vld [vmem:[#allocation2 + $0x30] sm:$0xff]
        %v1941 = vld [vmem:[#allocation2 + $0x38] sm:$0xff]
        %v1942 = vld [vmem:[#allocation2 + $0x40] sm:$0xff]
        %v1943 = vld [vmem:[#allocation2 + $0x48] sm:$0xff]
        %v1944 = vld [vmem:[#allocation2 + $0x50] sm:$0xff]
        %v1945 = vld [vmem:[#allocation2 + $0x58] sm:$0xff]
        %v1946 = vld [vmem:[#allocation2 + $0x60] sm:$0xff]
        %v1947 = vld [vmem:[#allocation2 + $0x68] sm:$0xff]
        %v1948 = vld [vmem:[#allocation2 + $0x70] sm:$0xff]
        %v1949 = vld [vmem:[#allocation2 + $0x78] sm:$0xff]
        %v1950 = vld [vmem:[#allocation2 + $0x80] sm:$0xff]
        %v1951 = vld [vmem:[#allocation2 + $0x88] sm:$0xff]
        %v1952 = vld [vmem:[#allocation2 + $0x90] sm:$0xff]
        %v1953 = vld [vmem:[#allocation2 + $0x98] sm:$0xff]
        %v1954 = vld [vmem:[#allocation2 + $0xa0] sm:$0xff]
        %v1955 = vld [vmem:[#allocation2 + $0xa8] sm:$0xff]
        %v1956 = vld [vmem:[#allocation2 + $0xb0] sm:$0xff]
        %v1957 = vld [vmem:[#allocation2 + $0xb8] sm:$0xff]
        %v1958 = vld [vmem:[#allocation2 + $0xc0] sm:$0xff]
        %v1959 = vld [vmem:[#allocation2 + $0xc8] sm:$0xff]
        %v1960 = vld [vmem:[#allocation2 + $0xd0] sm:$0xff]
        %v1961 = vld [vmem:[#allocation2 + $0xd8] sm:$0xff]
        %v1962 = vld [vmem:[#allocation2 + $0xe0] sm:$0xff]
        %v1963 = vld [vmem:[#allocation2 + $0xe8] sm:$0xff]
        %v1964 = vld [vmem:[#allocation2 + $0xf0] sm:$0xff]
        %v1965 = vld [vmem:[#allocation2 + $0xf8] sm:$0xff]
        %v1966 = vld [vmem:[%s5] sm:$0xff]
        %v1967 = vld [vmem:[%s5 + $0x8] sm:$0xff]
        %v1968 = vld [vmem:[%s5 + $0x10] sm:$0xff]
        %v1969 = vld [vmem:[%s5 + $0x18] sm:$0xff]
        %v1970 = vld [vmem:[%s5 + $0x20] sm:$0xff]
        %v1971 = vld [vmem:[%s5 + $0x28] sm:$0xff]
        %v1972 = vld [vmem:[%s5 + $0x30] sm:$0xff]
        %v1973 = vld [vmem:[%s5 + $0x38] sm:$0xff]
        %v1974 = vld [vmem:[%s5 + $0x40] sm:$0xff]
        %v1975 = vld [vmem:[%s5 + $0x48] sm:$0xff]
        %v1976 = vld [vmem:[%s5 + $0x50] sm:$0xff]
        %v1977 = vld [vmem:[%s5 + $0x58] sm:$0xff]
        %v1978 = vld [vmem:[%s5 + $0x60] sm:$0xff]
        %v1979 = vld [vmem:[%s5 + $0x68] sm:$0xff]
        %v1980 = vld [vmem:[%s5 + $0x70] sm:$0xff]
        %v1981 = vld [vmem:[%s5 + $0x78] sm:$0xff]
        %1983 = vset.pattern.permute.xlu0 0
        %1984 = vperm.xlu0 %1983, %v1966
        %v1985 = vpop.permute.xlu0 %1984
        %1988 = vset.pattern.permute.xlu0 0
        %1989 = vperm.xlu0 %1988, %v1967
        %v1990 = vpop.permute.xlu0 %1989
        %1993 = vset.pattern.permute.xlu0 0
        %1994 = vperm.xlu0 %1993, %v1968
        %v1995 = vpop.permute.xlu0 %1994
        %1998 = vset.pattern.permute.xlu0 0
        %1999 = vperm.xlu0 %1998, %v1969
        %v2000 = vpop.permute.xlu0 %1999
        %2003 = vset.pattern.permute.xlu0 0
        %2004 = vperm.xlu0 %2003, %v1970
        %v2005 = vpop.permute.xlu0 %2004
        %2008 = vset.pattern.permute.xlu0 0
        %2009 = vperm.xlu0 %2008, %v1971
        %v2010 = vpop.permute.xlu0 %2009
        %2013 = vset.pattern.permute.xlu0 0
        %2014 = vperm.xlu0 %2013, %v1972
        %v2015 = vpop.permute.xlu0 %2014
        %2018 = vset.pattern.permute.xlu0 0
        %2019 = vperm.xlu0 %2018, %v1973
        %v2020 = vpop.permute.xlu0 %2019
        %2023 = vset.pattern.permute.xlu0 0
        %2024 = vperm.xlu0 %2023, %v1974
        %v2025 = vpop.permute.xlu0 %2024
        %2028 = vset.pattern.permute.xlu0 0
        %2029 = vperm.xlu0 %2028, %v1975
        %v2030 = vpop.permute.xlu0 %2029
        %2033 = vset.pattern.permute.xlu0 0
        %2034 = vperm.xlu0 %2033, %v1976
        %v2035 = vpop.permute.xlu0 %2034
        %2038 = vset.pattern.permute.xlu0 0
        %2039 = vperm.xlu0 %2038, %v1977
        %v2040 = vpop.permute.xlu0 %2039
        %2043 = vset.pattern.permute.xlu0 0
        %2044 = vperm.xlu0 %2043, %v1978
        %v2045 = vpop.permute.xlu0 %2044
        %2048 = vset.pattern.permute.xlu0 0
        %2049 = vperm.xlu0 %2048, %v1979
        %v2050 = vpop.permute.xlu0 %2049
        %2053 = vset.pattern.permute.xlu0 0
        %2054 = vperm.xlu0 %2053, %v1980
        %v2055 = vpop.permute.xlu0 %2054
        %2058 = vset.pattern.permute.xlu0 0
        %2059 = vperm.xlu0 %2058, %v1981
        %v2060 = vpop.permute.xlu0 %2059
        %v2062 = vadd.f32 %v1934, %v1985
        %v2063 = vadd.f32 %v1935, %v1985
        %v2064 = vadd.f32 %v1936, %v1990
        %v2065 = vadd.f32 %v1937, %v1990
        %v2066 = vadd.f32 %v1938, %v1995
        %v2067 = vadd.f32 %v1939, %v1995
        %v2068 = vadd.f32 %v1940, %v2000
        %v2069 = vadd.f32 %v1941, %v2000
        %v2070 = vadd.f32 %v1942, %v2005
        %v2071 = vadd.f32 %v1943, %v2005
        %v2072 = vadd.f32 %v1944, %v2010
        %v2073 = vadd.f32 %v1945, %v2010
        %v2074 = vadd.f32 %v1946, %v2015
        %v2075 = vadd.f32 %v1947, %v2015
        %v2076 = vadd.f32 %v1948, %v2020
        %v2077 = vadd.f32 %v1949, %v2020
        %v2078 = vadd.f32 %v1950, %v2025
        %v2079 = vadd.f32 %v1951, %v2025
        %v2080 = vadd.f32 %v1952, %v2030
        %v2081 = vadd.f32 %v1953, %v2030
        %v2082 = vadd.f32 %v1954, %v2035
        %v2083 = vadd.f32 %v1955, %v2035
        %v2084 = vadd.f32 %v1956, %v2040
        %v2085 = vadd.f32 %v1957, %v2040
        %v2086 = vadd.f32 %v1958, %v2045
        %v2087 = vadd.f32 %v1959, %v2045
        %v2088 = vadd.f32 %v1960, %v2050
        %v2089 = vadd.f32 %v1961, %v2050
        %v2090 = vadd.f32 %v1962, %v2055
        %v2091 = vadd.f32 %v1963, %v2055
        %v2092 = vadd.f32 %v1964, %v2060
        %v2093 = vadd.f32 %v1965, %v2060
        %v2094 = vmax.f32 %v2062, 0.0
        %v2095 = vmax.f32 %v2063, 0.0
        %v2096 = vmax.f32 %v2064, 0.0
        %v2097 = vmax.f32 %v2065, 0.0
        %v2098 = vmax.f32 %v2066, 0.0
        %v2099 = vmax.f32 %v2067, 0.0
        %v2100 = vmax.f32 %v2068, 0.0
        %v2101 = vmax.f32 %v2069, 0.0
        %v2102 = vmax.f32 %v2070, 0.0
        %v2103 = vmax.f32 %v2071, 0.0
        %v2104 = vmax.f32 %v2072, 0.0
        %v2105 = vmax.f32 %v2073, 0.0
        %v2106 = vmax.f32 %v2074, 0.0
        %v2107 = vmax.f32 %v2075, 0.0
        %v2108 = vmax.f32 %v2076, 0.0
        %v2109 = vmax.f32 %v2077, 0.0
        %v2110 = vmax.f32 %v2078, 0.0
        %v2111 = vmax.f32 %v2079, 0.0
        %v2112 = vmax.f32 %v2080, 0.0
        %v2113 = vmax.f32 %v2081, 0.0
        %v2114 = vmax.f32 %v2082, 0.0
        %v2115 = vmax.f32 %v2083, 0.0
        %v2116 = vmax.f32 %v2084, 0.0
        %v2117 = vmax.f32 %v2085, 0.0
        %v2118 = vmax.f32 %v2086, 0.0
        %v2119 = vmax.f32 %v2087, 0.0
        %v2120 = vmax.f32 %v2088, 0.0
        %v2121 = vmax.f32 %v2089, 0.0
        %v2122 = vmax.f32 %v2090, 0.0
        %v2123 = vmax.f32 %v2091, 0.0
        %v2124 = vmax.f32 %v2092, 0.0
        %v2125 = vmax.f32 %v2093, 0.0
        %s2126 = sshra.s32 %s424, 7
        %s2127 = sand.u32 %s424, 127
        %s2128 = smul.addr %s2126, 8
        %s2129 = scalar_lea.vmem %s403, %s2128
        %v2130 = vld [vmem:[%s2129] sm:$0xff]
        %v2131 = vld [vmem:[%s2129 + $0x8] sm:$0xff]
        %v2132 = vld [vmem:[%s2129 + $0x10] sm:$0xff]
        %v2133 = vld [vmem:[%s2129 + $0x18] sm:$0xff]
        %v2134 = vld [vmem:[%s2129 + $0x20] sm:$0xff]
        %v2135 = vld [vmem:[%s2129 + $0x28] sm:$0xff]
        %v2136 = vld [vmem:[%s2129 + $0x30] sm:$0xff]
        %v2137 = vld [vmem:[%s2129 + $0x38] sm:$0xff]
        %v2138 = vld [vmem:[%s2129 + $0x40] sm:$0xff]
        %v2139 = vld [vmem:[%s2129 + $0x48] sm:$0xff]
        %v2140 = vld [vmem:[%s2129 + $0x50] sm:$0xff]
        %v2141 = vld [vmem:[%s2129 + $0x58] sm:$0xff]
        %v2142 = vld [vmem:[%s2129 + $0x60] sm:$0xff]
        %v2143 = vld [vmem:[%s2129 + $0x68] sm:$0xff]
        %v2144 = vld [vmem:[%s2129 + $0x70] sm:$0xff]
        %v2145 = vld [vmem:[%s2129 + $0x78] sm:$0xff]
        %v2146 = vld [vmem:[%s419] sm:$0xff]
        %v2147 = vld [vmem:[%s419 + $0x8] sm:$0xff]
        %v2148 = vld [vmem:[%s419 + $0x10] sm:$0xff]
        %v2149 = vld [vmem:[%s419 + $0x18] sm:$0xff]
        %v2150 = vld [vmem:[%s419 + $0x20] sm:$0xff]
        %v2151 = vld [vmem:[%s419 + $0x28] sm:$0xff]
        %v2152 = vld [vmem:[%s419 + $0x30] sm:$0xff]
        %v2153 = vld [vmem:[%s419 + $0x38] sm:$0xff]
        %v2154 = vld [vmem:[%s419 + $0x40] sm:$0xff]
        %v2155 = vld [vmem:[%s419 + $0x48] sm:$0xff]
        %v2156 = vld [vmem:[%s419 + $0x50] sm:$0xff]
        %v2157 = vld [vmem:[%s419 + $0x58] sm:$0xff]
        %v2158 = vld [vmem:[%s419 + $0x60] sm:$0xff]
        %v2159 = vld [vmem:[%s419 + $0x68] sm:$0xff]
        %v2160 = vld [vmem:[%s419 + $0x70] sm:$0xff]
        %v2161 = vld [vmem:[%s419 + $0x78] sm:$0xff]
        %v2162 = vadd.f32 %v2094, %v2130
        %v2163 = vadd.f32 %v2095, %v2131
        %v2164 = vadd.f32 %v2096, %v2132
        %v2165 = vadd.f32 %v2097, %v2133
        %v2166 = vadd.f32 %v2098, %v2134
        %v2167 = vadd.f32 %v2099, %v2135
        %v2168 = vadd.f32 %v2100, %v2136
        %v2169 = vadd.f32 %v2101, %v2137
        %v2170 = vadd.f32 %v2102, %v2138
        %v2171 = vadd.f32 %v2103, %v2139
        %v2172 = vadd.f32 %v2104, %v2140
        %v2173 = vadd.f32 %v2105, %v2141
        %v2174 = vadd.f32 %v2106, %v2142
        %v2175 = vadd.f32 %v2107, %v2143
        %v2176 = vadd.f32 %v2108, %v2144
        %v2177 = vadd.f32 %v2109, %v2145
        %2178 = vst [vmem:[%s397] sm:$0xff] %v2162
        %2179 = vst [vmem:[%s397 + $0x8] sm:$0xff] %v2163
        %2180 = vst [vmem:[%s397 + $0x10] sm:$0xff] %v2164
        %2181 = vst [vmem:[%s397 + $0x18] sm:$0xff] %v2165
        %2182 = vst [vmem:[%s397 + $0x20] sm:$0xff] %v2166
        %2183 = vst [vmem:[%s397 + $0x28] sm:$0xff] %v2167
        %2184 = vst [vmem:[%s397 + $0x30] sm:$0xff] %v2168
        %2185 = vst [vmem:[%s397 + $0x38] sm:$0xff] %v2169
        %2186 = vst [vmem:[%s397 + $0x40] sm:$0xff] %v2170
        %2187 = vst [vmem:[%s397 + $0x48] sm:$0xff] %v2171
        %2188 = vst [vmem:[%s397 + $0x50] sm:$0xff] %v2172
        %2189 = vst [vmem:[%s397 + $0x58] sm:$0xff] %v2173
        %2190 = vst [vmem:[%s397 + $0x60] sm:$0xff] %v2174
        %2191 = vst [vmem:[%s397 + $0x68] sm:$0xff] %v2175
        %2192 = vst [vmem:[%s397 + $0x70] sm:$0xff] %v2176
        %2193 = vst [vmem:[%s397 + $0x78] sm:$0xff] %v2177
        %v2194 = vadd.f32 %v2110, %v2146
        %v2195 = vadd.f32 %v2111, %v2147
        %v2196 = vadd.f32 %v2112, %v2148
        %v2197 = vadd.f32 %v2113, %v2149
        %v2198 = vadd.f32 %v2114, %v2150
        %v2199 = vadd.f32 %v2115, %v2151
        %v2200 = vadd.f32 %v2116, %v2152
        %v2201 = vadd.f32 %v2117, %v2153
        %v2202 = vadd.f32 %v2118, %v2154
        %v2203 = vadd.f32 %v2119, %v2155
        %v2204 = vadd.f32 %v2120, %v2156
        %v2205 = vadd.f32 %v2121, %v2157
        %v2206 = vadd.f32 %v2122, %v2158
        %v2207 = vadd.f32 %v2123, %v2159
        %v2208 = vadd.f32 %v2124, %v2160
        %v2209 = vadd.f32 %v2125, %v2161
        %2210 = vst [vmem:[%s397 + $0x80] sm:$0xff] %v2194
        %2211 = vst [vmem:[%s397 + $0x88] sm:$0xff] %v2195
        %2212 = vst [vmem:[%s397 + $0x90] sm:$0xff] %v2196
        %2213 = vst [vmem:[%s397 + $0x98] sm:$0xff] %v2197
        %2214 = vst [vmem:[%s397 + $0xa0] sm:$0xff] %v2198
        %2215 = vst [vmem:[%s397 + $0xa8] sm:$0xff] %v2199
        %2216 = vst [vmem:[%s397 + $0xb0] sm:$0xff] %v2200
        %2217 = vst [vmem:[%s397 + $0xb8] sm:$0xff] %v2201
        %2218 = vst [vmem:[%s397 + $0xc0] sm:$0xff] %v2202
        %2219 = vst [vmem:[%s397 + $0xc8] sm:$0xff] %v2203
        %2220 = vst [vmem:[%s397 + $0xd0] sm:$0xff] %v2204
        %2221 = vst [vmem:[%s397 + $0xd8] sm:$0xff] %v2205
        %2222 = vst [vmem:[%s397 + $0xe0] sm:$0xff] %v2206
        %2223 = vst [vmem:[%s397 + $0xe8] sm:$0xff] %v2207
        %2224 = vst [vmem:[%s397 + $0xf0] sm:$0xff] %v2208
        %2225 = vst [vmem:[%s397 + $0xf8] sm:$0xff] %v2209
        %s2226 = sand.u32 %s223, 1
        %s2227 = scalar_lea.sflag [#allocation5], %s2226
        %s2228 = sand.u32 %s223, 1
        %s2229 = smul.addr %s2228, 256
        %s2230 = scalar_lea.vmem [#allocation9], %s2229
        // Predicated region
        $region61: #{tpu_custom_call.1} parent=47 // pred_check
          %p2231 = pneg %p233
        $region62: #{tpu_custom_call.1} parent=47 // pred_check_branch
          %2233 = sbr.rel (%p2231) target = $region64
        $region63: #{tpu_custom_call.1} parent=47 // pred_region
          %s2234 = smul.u32 16, %s28
          %s2235 = smul.u32 2, %s27
          %2237 = vsyncadd %s2227, 0
          %s2238 = smul.addr %s2234, 2
          %s2239 = sadd.s32 %s2235, %s2238
          %s2240 = smul.addr %s2239, 8
          %s2241 = scalar_lea.hbm %s7, %s2240
          %s2242 = sshll.u32 %s2230, 4
          %s2243 = int_to_ptr.vmem [resolvable:$true] %s2242
          %s2244 = sshll.u32 %s2241, 4
          %s2245 = int_to_ptr.hbm [resolvable:$true] %s2244
          %2250 = dma.vmem_to_hbm [thread:$0]  %s2243, 4096, %s2245, %s2227, 256, 256, 16
        $region64: #{tpu_custom_call.1} parent=47 // pred_fallthru
          _
      $region48: #{tpu_custom_call.1} parent=5 // pred_fallthru
        _
      %p2251 = scmp.le.s32.totalorder 2, %s18
      // Predicated region
      $region65: #{tpu_custom_call.1} parent=5 // pred_check
        %p2252 = pneg %p2251
      $region66: #{tpu_custom_call.1} parent=5 // pred_check_branch
        %2254 = sbr.rel (%p2252) target = $region68
      $region67: #{tpu_custom_call.1} parent=5 // pred_region
        %s2255 = ssub.s32 %s18, 2
        // Predicated region
        $region69: #{tpu_custom_call.1} parent=67 // pred_check
          %p2256 = pneg %p239
        $region70: #{tpu_custom_call.1} parent=67 // pred_check_branch
          %2258 = sbr.rel (%p2256) target = $region72
        $region71: #{tpu_custom_call.1} parent=67 // pred_region
          %s2259 = sand.u32 %s224, 1
          %s2260 = scalar_lea.sflag [#allocation5], %s2259
          %s2261 = sand.u32 %s224, 1
          %s2262 = smul.addr %s2261, 256
          %s2263 = scalar_lea.vmem [#allocation9], %s2262
          %2265 = dma.done %s2260, 4096
        $region72: #{tpu_custom_call.1} parent=67 // pred_fallthru
          _
      $region68: #{tpu_custom_call.1} parent=5 // pred_fallthru
        _
    $region6: #{tpu_custom_call.1} parent=1 // loop_footer
      %s22 = sadd.s32 1, %s18
    $region7: #{tpu_custom_call.1} parent=1 // loop_footer_branch
      %17 = sbr.rel target = $region3
    $region8: #{tpu_custom_call.1} parent=1 // loop_exit
      _
    %2266 = vsyncpa [#allocation4], 1
    %s2267 = scalar_lea.sflag [#allocation4], 1
    %2268 = vsyncpa %s2267, 1
    %2269 = vsyncpa [#allocation7], 1
    %2270 = vsyncpa [#allocation5], 1
    %s2271 = scalar_lea.sflag [#allocation5], 1
    %2272 = vsyncpa %s2271, 1

</llo_original>
